<compile_context>
chip_gen: v7x
topology: tpu7x:2x2x1
jax: 0.10.0
libtpu: 0.0.40
codegen_flags: <defaults>
</compile_context>

<pallas_src>
import functools

import jax
import jax.numpy as jnp
from jax.experimental import pallas as pl
from jax.experimental.pallas import tpu as pltpu

LN_EPS = 1e-5  # PyTorch LayerNorm default


def _round_up(a, b):
    return (a + b - 1) // b * b


def _padded_tile_bytes(rows, cols, itemsize):
    # VMEM tiles are laid out in (8 sublane, 128 lane) units.
    return _round_up(max(rows, 1), 8) * _round_up(max(cols, 1), 128) * itemsize


def _tpu_vmem_budget_bytes():
    """~75% of physical VMEM: ~48 MiB on v7x (64 MiB), ~96 MiB on v5e/v6e (128 MiB)."""
    cap = 64 * 1024 * 1024
    try:
        cap = int(pltpu.get_tpu_info().vmem_capacity_bytes)
    except Exception:
        pass
    return (cap * 3) // 4


def _is_dual_tensorcore():
    """True on chips with 2 TensorCores sharing the grid (v7x)."""
    try:
        return "v7" in jax.devices()[0].device_kind.lower()
    except Exception:
        return False


def mlp_kernel(x_ref, g_ref, beta_ref, w1_ref, b1_ref, w2_ref, b2_ref, o_ref,
               xn_ref, acc_ref, *, inv_dim):
    k = pl.program_id(1)

    # ---- k == 0: fused one-pass LayerNorm (f32) + accumulator init ----
    @pl.when(k == 0)
    def _():
        x = x_ref[...].astype(jnp.float32)                      # (tm, dim)
        s1 = jnp.sum(x, axis=-1, keepdims=True)
        s2 = jnp.sum(x * x, axis=-1, keepdims=True)
        mean = s1 * inv_dim
        # Clamp: E[x^2] - mean^2 can go slightly negative in f32.
        var = jnp.maximum(s2 * inv_dim - mean * mean, 0.0)
        xn = (x - mean) * jax.lax.rsqrt(var + LN_EPS)
        xn = xn * g_ref[...] + beta_ref[...]
        xn_ref[...] = xn.astype(xn_ref.dtype)                   # matmul dtype
        acc_ref[...] = jnp.zeros_like(acc_ref)

    # ---- stream one hidden block: Linear1 + ReLU + partial Linear2 ----
    # Padded hidden columns have zero weights/bias -> ReLU(0)=0 -> contribute 0.
    h = jnp.dot(xn_ref[...], w1_ref[...], preferred_element_type=jnp.float32)
    h = jnp.maximum(h + b1_ref[...], 0.0)
    acc_ref[...] += jnp.dot(h.astype(w2_ref.dtype), w2_ref[...],
                            preferred_element_type=jnp.float32)

    # ---- last hidden block: add output bias, store ----
    @pl.when(k == pl.num_programs(1) - 1)
    def _():
        o_ref[...] = (acc_ref[...] + b2_ref[...]).astype(o_ref.dtype)


def prepare_mlp_params(gamma, beta, w1, b1, w2, b2, *, use_bf16_matmul=False):
    """One-time parameter preparation (hoisted out of the per-call jitted path).

    w1: [dim, hidden], w2: [hidden, proj], i.e. y = x @ W + b (transpose of
    PyTorch's Linear weight layout).  Only the hidden axis is zero-padded to a
    multiple of 128; dim/proj stay unpadded.  bf16 weights are recommended on
    all TPU generations (v5e/v6e/v7x): the MXU is bf16-native, weight DMA and
    VMEM footprint halve; LayerNorm and matmul accumulation remain f32.
    """
    dim, hidden = w1.shape
    proj = w2.shape[1]
    hid_p = _round_up(hidden, 128)

    f32 = jnp.float32
    mm_dtype = jnp.bfloat16 if use_bf16_matmul else w1.dtype

    g = jnp.asarray(gamma, f32).reshape(1, dim)
    bt = jnp.asarray(beta, f32).reshape(1, dim)
    w1p = jnp.pad(w1, ((0, 0), (0, hid_p - hidden))).astype(mm_dtype)
    b1p = jnp.pad(jnp.asarray(b1, f32).reshape(1, hidden),
                  ((0, 0), (0, hid_p - hidden)))
    w2p = jnp.pad(w2, ((0, hid_p - hidden), (0, 0))).astype(mm_dtype)
    b2p = jnp.asarray(b2, f32).reshape(1, proj)
    return (g, bt, w1p, b1p, w2p, b2p)


@jax.jit
def mlp_forward(x, params):
    g, bt, w1p, b1p, w2p, b2p = params
    B, dim = x.shape
    hid_p = w1p.shape[1]
    proj = w2p.shape[1]
    mm_dtype = w1p.dtype
    wbytes = jnp.dtype(mm_dtype).itemsize
    xbytes = jnp.dtype(x.dtype).itemsize

    budget = _tpu_vmem_budget_bytes()
    dual_core = _is_dual_tensorcore()

    # ---- block_m (generation-aware) ----
    block_m = None
    for cand in (512, 256, 128):
        if dual_core:
            # v7x: keep >= 2 grid steps so both TensorCores get work.
            if pl.cdiv(B, cand) >= 2:
                block_m = cand
                break
        else:
            # single TC: the grid is a serial loop -> largest aligned tile wins.
            if B >= cand:
                block_m = cand
                break
    if block_m is None:
        block_m = min(128, _round_up(B, 8))
    B_p = _round_up(B, block_m)

    # ---- block_h: largest divisor of hid_p (multiple of 128) fitting VMEM ----
    def footprint(bh):
        return (
            2 * _padded_tile_bytes(block_m, dim, xbytes)            # x tiles (dbl-buf)
            + 2 * _padded_tile_bytes(block_m, proj, 4)              # out tiles
            + 2 * (_padded_tile_bytes(dim, bh, wbytes)
                   + _padded_tile_bytes(bh, proj, wbytes))          # W1/W2 k-blocks
            + 2 * (_padded_tile_bytes(1, bh, 4)
                   + _padded_tile_bytes(1, proj, 4)
                   + 2 * _padded_tile_bytes(1, dim, 4))             # biases/gamma/beta
            + _padded_tile_bytes(block_m, dim, wbytes)              # xn scratch
            + _padded_tile_bytes(block_m, proj, 4)                  # acc scratch
            + _padded_tile_bytes(block_m, bh, 4)                    # h intermediate
        )

    block_h = 128
    nk = 1
    while nk * 128 <= hid_p:
        if hid_p % nk == 0 and (hid_p // nk) % 128 == 0:
            cand = hid_p // nk
            if footprint(cand) <= budget:
                block_h = cand
                break
        nk += 1
    # TODO(synk): if even block_h=128 overflows the budget (huge block_m*dim),
    # also shrink block_m; and single-buffer the grid-invariant operands
    # (gamma/beta/b2) via pl.Buffered(1) once that path is verified on Mosaic.

    num_m = B_p // block_m
    num_k = hid_p // block_h
    vmem_limit = int(min(budget, max(2 * footprint(block_h), 32 * 1024 * 1024)))

    # Only the batch axis is ever padded (and only when ragged).
    xp = x if B_p == B else jnp.pad(x, ((0, B_p - B), (0, 0)))

    out_p = pl.pallas_call(
        functools.partial(mlp_kernel, inv_dim=1.0 / dim),
        out_shape=jax.ShapeDtypeStruct((B_p, proj), x.dtype),
        grid_spec=pltpu.PrefetchScalarGridSpec(
            num_scalar_prefetch=0,
            grid=(num_m, num_k),
            in_specs=[
                pl.BlockSpec((block_m, dim), lambda i, k: (i, 0)),    # x
                pl.BlockSpec((1, dim), lambda i, k: (0, 0)),          # gamma
                pl.BlockSpec((1, dim), lambda i, k: (0, 0)),          # beta
                pl.BlockSpec((dim, block_h), lambda i, k: (0, k)),    # W1 k-block
                pl.BlockSpec((1, block_h), lambda i, k: (0, k)),      # b1 k-block
                pl.BlockSpec((block_h, proj), lambda i, k: (k, 0)),   # W2 k-block
                pl.BlockSpec((1, proj), lambda i, k: (0, 0)),         # b2
            ],
            out_specs=pl.BlockSpec((block_m, proj), lambda i, k: (i, 0)),
            scratch_shapes=[
                pltpu.VMEM((block_m, dim), mm_dtype),       # LN output (matmul dtype)
                pltpu.VMEM((block_m, proj), jnp.float32),   # Linear2 accumulator
            ],
        ),
        compiler_params=pltpu.CompilerParams(
            dimension_semantics=("parallel", "arbitrary"),
            vmem_limit_bytes=vmem_limit,
        ),
    )(xp, g, bt, w1p, b1p, w2p, b2p)

    return out_p if B_p == B else out_p[:B]


def reference(x, gamma, beta, w1, b1, w2, b2):
    xf = x.astype(jnp.float32)
    mu = jnp.mean(xf, axis=-1, keepdims=True)
    var = jnp.mean((xf - mu) ** 2, axis=-1, keepdims=True)
    xn = (xf - mu) / jnp.sqrt(var + LN_EPS) * gamma + beta
    h = jnp.maximum(xn @ w1 + b1, 0.0)
    return h @ w2 + b2


if __name__ == "__main__":
    # Small shapes consistent with MLP(dim, projection_size, hidden_size).
    B, dim, hidden, proj = 256, 32, 512, 16

    key = jax.random.PRNGKey(0)
    kx, kw1, kb1, kw2, kb2 = jax.random.split(key, 5)

    x = jax.random.normal(kx, (B, dim), dtype=jnp.float32)

    # Deterministic parameter init (synthetic; shapes match the nn.Module).
    gamma = jnp.ones((dim,), jnp.float32)           # LayerNorm weight
    beta = jnp.zeros((dim,), jnp.float32)           # LayerNorm bias
    w1 = jax.random.normal(kw1, (dim, hidden), jnp.float32) * (1.0 / jnp.sqrt(dim))
    b1 = jax.random.normal(kb1, (hidden,), jnp.float32) * 0.01
    w2 = jax.random.normal(kw2, (hidden, proj), jnp.float32) * (1.0 / jnp.sqrt(hidden))
    b2 = jax.random.normal(kb2, (proj,), jnp.float32) * 0.01

    ref = reference(x, gamma, beta, w1, b1, w2, b2)

    # f32 matmul path (tight tolerance). Parameters prepared once, reused per call.
    params_f32 = prepare_mlp_params(gamma, beta, w1, b1, w2, b2)
    out = jax.block_until_ready(mlp_forward(x, params_f32))
    assert out.shape == (B, proj)
    assert jnp.allclose(out, ref, atol=2e-4, rtol=2e-4)

    # bf16-into-MXU path (recommended on v5e/v6e/v7x). Looser tolerance: the LN
    # output is cast to bf16 before the first matmul (accumulation stays f32).
    params_bf16 = prepare_mlp_params(gamma, beta, w1, b1, w2, b2, use_bf16_matmul=True)
    out_bf16 = jax.block_until_ready(mlp_forward(x, params_bf16))
    assert out_bf16.shape == (B, proj)
    assert jnp.allclose(out_bf16, ref, atol=5e-2, rtol=5e-2)

    print("KERNEL_OK")
</pallas_src>

<mosaic_0001>
module attributes {stable_mosaic.version = 11 : i64} {
  func.func @mlp_kernel(%arg0: i32, %arg1: i32, %arg2: memref<256x32xf32, #tpu.memory_space<vmem>>, %arg3: memref<1x32xf32, #tpu.memory_space<vmem>>, %arg4: memref<1x32xf32, #tpu.memory_space<vmem>>, %arg5: memref<32x512xf32, #tpu.memory_space<vmem>>, %arg6: memref<1x512xf32, #tpu.memory_space<vmem>>, %arg7: memref<512x16xf32, #tpu.memory_space<vmem>>, %arg8: memref<1x16xf32, #tpu.memory_space<vmem>>, %arg9: memref<256x16xf32, #tpu.memory_space<vmem>>, %arg10: memref<256x32xf32, #tpu.memory_space<vmem>>, %arg11: memref<256x16xf32, #tpu.memory_space<vmem>>) attributes {dimension_semantics = [#tpu.dimension_semantics<parallel>, #tpu.dimension_semantics<arbitrary>], iteration_bounds = array<i64: 1, 1>, scalar_prefetch = 0 : i64, scratch_operands = 2 : i64, tpu.core_type = #tpu.core_type<tc>, window_params = [{transform_indices = @transform_0, window_bounds = array<i64: 256, 32>}, {pipeline_mode = #tpu.pipeline_mode<synchronous>, transform_indices = @transform_1, window_bounds = array<i64: 1, 32>}, {pipeline_mode = #tpu.pipeline_mode<synchronous>, transform_indices = @transform_2, window_bounds = array<i64: 1, 32>}, {transform_indices = @transform_3, window_bounds = array<i64: 32, 512>}, {transform_indices = @transform_4, window_bounds = array<i64: 1, 512>}, {transform_indices = @transform_5, window_bounds = array<i64: 512, 16>}, {pipeline_mode = #tpu.pipeline_mode<synchronous>, transform_indices = @transform_6, window_bounds = array<i64: 1, 16>}, {transform_indices = @transform_7, window_bounds = array<i64: 256, 16>}]} {
    %c0_i32 = arith.constant 0 : i32
    %0 = arith.cmpi eq, %arg1, %c0_i32 : i32
    %1 = arith.extui %0 : i1 to i32
    %c0_i32_0 = arith.constant 0 : i32
    %2 = arith.cmpi ne, %1, %c0_i32_0 : i32
    scf.if %2 {
      %c0_16 = arith.constant 0 : index
      %c0_17 = arith.constant 0 : index
      %19 = vector.load %arg2[%c0_16, %c0_17] : memref<256x32xf32, #tpu.memory_space<vmem>>, vector<256x32xf32>
      %cst_18 = arith.constant dense<0.000000e+00> : vector<256xf32>
      %20 = vector.multi_reduction <add>, %19, %cst_18 [1] : vector<256x32xf32> to vector<256xf32>
      %21 = vector.shape_cast %20 : vector<256xf32> to vector<256x1xf32>
      %22 = arith.mulf %19, %19 : vector<256x32xf32>
      %cst_19 = arith.constant dense<0.000000e+00> : vector<256xf32>
      %23 = vector.multi_reduction <add>, %22, %cst_19 [1] : vector<256x32xf32> to vector<256xf32>
      %24 = vector.shape_cast %23 : vector<256xf32> to vector<256x1xf32>
      %cst_20 = arith.constant 3.125000e-02 : f32
      %25 = vector.broadcast %cst_20 : f32 to vector<256x1xf32>
      %26 = arith.mulf %21, %25 : vector<256x1xf32>
      %cst_21 = arith.constant 3.125000e-02 : f32
      %27 = vector.broadcast %cst_21 : f32 to vector<256x1xf32>
      %28 = arith.mulf %24, %27 : vector<256x1xf32>
      %29 = arith.mulf %26, %26 : vector<256x1xf32>
      %30 = arith.subf %28, %29 : vector<256x1xf32>
      %cst_22 = arith.constant 0.000000e+00 : f32
      %31 = vector.broadcast %cst_22 : f32 to vector<256x1xf32>
      %32 = arith.maximumf %30, %31 : vector<256x1xf32>
      %33 = vector.broadcast %26 : vector<256x1xf32> to vector<256x32xf32>
      %34 = arith.subf %19, %33 : vector<256x32xf32>
      %cst_23 = arith.constant 9.99999974E-6 : f32
      %35 = vector.broadcast %cst_23 : f32 to vector<256x1xf32>
      %36 = arith.addf %32, %35 : vector<256x1xf32>
      %37 = math.rsqrt %36 : vector<256x1xf32>
      %38 = vector.broadcast %37 : vector<256x1xf32> to vector<256x32xf32>
      %39 = arith.mulf %34, %38 : vector<256x32xf32>
      %c0_24 = arith.constant 0 : index
      %c0_25 = arith.constant 0 : index
      %40 = vector.load %arg3[%c0_24, %c0_25] : memref<1x32xf32, #tpu.memory_space<vmem>>, vector<1x32xf32>
      %41 = vector.broadcast %40 : vector<1x32xf32> to vector<256x32xf32>
      %42 = arith.mulf %39, %41 : vector<256x32xf32>
      %c0_26 = arith.constant 0 : index
      %c0_27 = arith.constant 0 : index
      %43 = vector.load %arg4[%c0_26, %c0_27] : memref<1x32xf32, #tpu.memory_space<vmem>>, vector<1x32xf32>
      %44 = vector.broadcast %43 : vector<1x32xf32> to vector<256x32xf32>
      %45 = arith.addf %42, %44 : vector<256x32xf32>
      %c0_28 = arith.constant 0 : index
      %c0_29 = arith.constant 0 : index
      %46 = vector.load %arg10[%c0_28, %c0_29] : memref<256x32xf32, #tpu.memory_space<vmem>>, vector<256x32xf32>
      tpu.vector_store %arg10[%c0_28, %c0_29], %45 {strides = array<i32>} : memref<256x32xf32, #tpu.memory_space<vmem>>, vector<256x32xf32>,
      %cst_30 = arith.constant 0.000000e+00 : f32
      %47 = vector.broadcast %cst_30 : f32 to vector<256x16xf32>
      %c0_31 = arith.constant 0 : index
      %c0_32 = arith.constant 0 : index
      %48 = vector.load %arg11[%c0_31, %c0_32] : memref<256x16xf32, #tpu.memory_space<vmem>>, vector<256x16xf32>
      tpu.vector_store %arg11[%c0_31, %c0_32], %47 {strides = array<i32>} : memref<256x16xf32, #tpu.memory_space<vmem>>, vector<256x16xf32>,
    } else {
    }
    %c0 = arith.constant 0 : index
    %c0_1 = arith.constant 0 : index
    %3 = vector.load %arg10[%c0, %c0_1] : memref<256x32xf32, #tpu.memory_space<vmem>>, vector<256x32xf32>
    %c0_2 = arith.constant 0 : index
    %c0_3 = arith.constant 0 : index
    %4 = vector.load %arg5[%c0_2, %c0_3] : memref<32x512xf32, #tpu.memory_space<vmem>>, vector<32x512xf32>
    %cst = arith.constant dense<0.000000e+00> : vector<256x512xf32>
    %5 = tpu.matmul %3, %4, %cst {dimension_numbers = #tpu.dot_dimension_numbers<[1], [0], [0], [1], [0, 0, 1, 1], [], []>} : vector<256x32xf32>, vector<32x512xf32>, vector<256x512xf32> -> vector<256x512xf32>
    %c0_4 = arith.constant 0 : index
    %c0_5 = arith.constant 0 : index
    %6 = vector.load %arg6[%c0_4, %c0_5] : memref<1x512xf32, #tpu.memory_space<vmem>>, vector<1x512xf32>
    %7 = vector.broadcast %6 : vector<1x512xf32> to vector<256x512xf32>
    %8 = arith.addf %5, %7 : vector<256x512xf32>
    %cst_6 = arith.constant 0.000000e+00 : f32
    %9 = vector.broadcast %cst_6 : f32 to vector<256x512xf32>
    %10 = arith.maximumf %8, %9 : vector<256x512xf32>
    %c0_7 = arith.constant 0 : index
    %c0_8 = arith.constant 0 : index
    %11 = vector.load %arg11[%c0_7, %c0_8] : memref<256x16xf32, #tpu.memory_space<vmem>>, vector<256x16xf32>
    %c0_9 = arith.constant 0 : index
    %c0_10 = arith.constant 0 : index
    %12 = vector.load %arg7[%c0_9, %c0_10] : memref<512x16xf32, #tpu.memory_space<vmem>>, vector<512x16xf32>
    %cst_11 = arith.constant dense<0.000000e+00> : vector<256x16xf32>
    %13 = tpu.matmul %10, %12, %cst_11 {dimension_numbers = #tpu.dot_dimension_numbers<[1], [0], [0], [1], [0, 0, 1, 1], [], []>} : vector<256x512xf32>, vector<512x16xf32>, vector<256x16xf32> -> vector<256x16xf32>
    %14 = arith.addf %11, %13 : vector<256x16xf32>
    %c0_12 = arith.constant 0 : index
    %c0_13 = arith.constant 0 : index
    %15 = vector.load %arg11[%c0_12, %c0_13] : memref<256x16xf32, #tpu.memory_space<vmem>>, vector<256x16xf32>
    tpu.vector_store %arg11[%c0_12, %c0_13], %14 {strides = array<i32>} : memref<256x16xf32, #tpu.memory_space<vmem>>, vector<256x16xf32>,
    %c0_i32_14 = arith.constant 0 : i32
    %16 = arith.cmpi eq, %arg1, %c0_i32_14 : i32
    %17 = arith.extui %16 : i1 to i32
    %c0_i32_15 = arith.constant 0 : i32
    %18 = arith.cmpi ne, %17, %c0_i32_15 : i32
    scf.if %18 {
      %c0_16 = arith.constant 0 : index
      %c0_17 = arith.constant 0 : index
      %19 = vector.load %arg11[%c0_16, %c0_17] : memref<256x16xf32, #tpu.memory_space<vmem>>, vector<256x16xf32>
      %c0_18 = arith.constant 0 : index
      %c0_19 = arith.constant 0 : index
      %20 = vector.load %arg8[%c0_18, %c0_19] : memref<1x16xf32, #tpu.memory_space<vmem>>, vector<1x16xf32>
      %21 = vector.broadcast %20 : vector<1x16xf32> to vector<256x16xf32>
      %22 = arith.addf %19, %21 : vector<256x16xf32>
      %c0_20 = arith.constant 0 : index
      %c0_21 = arith.constant 0 : index
      %23 = vector.load %arg9[%c0_20, %c0_21] : memref<256x16xf32, #tpu.memory_space<vmem>>, vector<256x16xf32>
      tpu.vector_store %arg9[%c0_20, %c0_21], %22 {strides = array<i32>} : memref<256x16xf32, #tpu.memory_space<vmem>>, vector<256x16xf32>,
    } else {
    }
    return
  }
  func.func @transform_0(%arg0: i32, %arg1: i32) -> (i32, i32) {
    %c0_i32 = arith.constant 0 : i32
    %c0_i32_0 = arith.constant 0 : i32
    return %arg0, %c0_i32 : i32, i32
  }
  func.func @transform_1(%arg0: i32, %arg1: i32) -> (i32, i32) {
    %c0_i32 = arith.constant 0 : i32
    %c0_i32_0 = arith.constant 0 : i32
    %c0_i32_1 = arith.constant 0 : i32
    return %c0_i32, %c0_i32_0 : i32, i32
  }
  func.func @transform_2(%arg0: i32, %arg1: i32) -> (i32, i32) {
    %c0_i32 = arith.constant 0 : i32
    %c0_i32_0 = arith.constant 0 : i32
    %c0_i32_1 = arith.constant 0 : i32
    return %c0_i32, %c0_i32_0 : i32, i32
  }
  func.func @transform_3(%arg0: i32, %arg1: i32) -> (i32, i32) {
    %c0_i32 = arith.constant 0 : i32
    %c0_i32_0 = arith.constant 0 : i32
    return %c0_i32, %arg1 : i32, i32
  }
  func.func @transform_4(%arg0: i32, %arg1: i32) -> (i32, i32) {
    %c0_i32 = arith.constant 0 : i32
    %c0_i32_0 = arith.constant 0 : i32
    return %c0_i32, %arg1 : i32, i32
  }
  func.func @transform_5(%arg0: i32, %arg1: i32) -> (i32, i32) {
    %c0_i32 = arith.constant 0 : i32
    %c0_i32_0 = arith.constant 0 : i32
    return %arg1, %c0_i32 : i32, i32
  }
  func.func @transform_6(%arg0: i32, %arg1: i32) -> (i32, i32) {
    %c0_i32 = arith.constant 0 : i32
    %c0_i32_0 = arith.constant 0 : i32
    %c0_i32_1 = arith.constant 0 : i32
    return %c0_i32, %c0_i32_0 : i32, i32
  }
  func.func @transform_7(%arg0: i32, %arg1: i32) -> (i32, i32) {
    %c0_i32 = arith.constant 0 : i32
    %c0_i32_0 = arith.constant 0 : i32
    return %arg0, %c0_i32 : i32, i32
  }
}

</mosaic_0001>

<llo_original>
// kernel: mlp_forward.1
$region0: #{mlp_forward.1}
  #allocation0 [shape = 'u32[]', space=smem, size = 0x4, offset = 0x4, fixed_abs, tag = 'smem constant byte address 0x4 - core index']
  #allocation1 [shape = 'u32[144,128]{1,0:T(1,128)}', space=vmem, size = 0x12000, scoped, tag = 'internal scratch']
  #allocation2 [shape = 'f32[256,32]{1,0:T(8,128)}', space=vmem, size = 0x20000, scoped, tag = 'scratch operand']
  #allocation3 [shape = 'f32[256,16]{1,0:T(8,128)}', space=vmem, size = 0x20000, scoped, tag = 'scratch operand']
  %s0 = inlined_call_operand.vmem [shape: f32[256,32], index: 0, kind: input, shape index: {}]
  %s1 = inlined_call_operand.vmem [shape: f32[1,32], index: 1, kind: input, shape index: {}]
  %s2 = inlined_call_operand.vmem [shape: f32[1,32], index: 2, kind: input, shape index: {}]
  %s3 = inlined_call_operand.vmem [shape: f32[32,512], index: 3, kind: input, shape index: {}]
  %s4 = inlined_call_operand.vmem [shape: f32[1,512], index: 4, kind: input, shape index: {}]
  %s5 = inlined_call_operand.vmem [shape: f32[512,16], index: 5, kind: input, shape index: {}]
  %s6 = inlined_call_operand.vmem [shape: f32[1,16], index: 6, kind: input, shape index: {}]
  %s7 = inlined_call_operand.vmem [shape: f32[256,16], index: 7, kind: output, shape index: {}]
  %s8 = sld [smem:[#allocation0]]
  $region46: #{mlp_forward.1} parent=0
    _
  %s10 = ssub.s32 1, %s8
  %s11 = scalar_select 0, %s10, %s8
  // Predicated region
  $region2: #{mlp_forward.1} parent=0 // pred_check
    _
  $region3: #{mlp_forward.1} parent=0 // pred_check_branch
    %13 = sbr.rel (0) target = $region5
  $region4: #{mlp_forward.1} parent=0 // pred_region
    _
  $region5: #{mlp_forward.1} parent=0 // pred_fallthru
    _
  // Predicated region
  $region6: #{mlp_forward.1} parent=0 // pred_check
    _
  $region7: #{mlp_forward.1} parent=0 // pred_check_branch
    %15 = sbr.rel (0) target = $region9
  $region8: #{mlp_forward.1} parent=0 // pred_region
    _
  $region9: #{mlp_forward.1} parent=0 // pred_fallthru
    _
  // Predicated region
  $region10: #{mlp_forward.1} parent=0 // pred_check
    _
  $region11: #{mlp_forward.1} parent=0 // pred_check_branch
    %17 = sbr.rel (0) target = $region13
  $region12: #{mlp_forward.1} parent=0 // pred_region
    _
  $region13: #{mlp_forward.1} parent=0 // pred_fallthru
    _
  // Predicated region
  $region14: #{mlp_forward.1} parent=0 // pred_check
    _
  $region15: #{mlp_forward.1} parent=0 // pred_check_branch
    %19 = sbr.rel (0) target = $region17
  $region16: #{mlp_forward.1} parent=0 // pred_region
    _
  $region17: #{mlp_forward.1} parent=0 // pred_fallthru
    _
  // Predicated region
  $region18: #{mlp_forward.1} parent=0 // pred_check
    _
  $region19: #{mlp_forward.1} parent=0 // pred_check_branch
    %21 = sbr.rel (0) target = $region21
  $region20: #{mlp_forward.1} parent=0 // pred_region
    _
  $region21: #{mlp_forward.1} parent=0 // pred_fallthru
    _
  // Predicated region
  $region22: #{mlp_forward.1} parent=0 // pred_check
    _
  $region23: #{mlp_forward.1} parent=0 // pred_check_branch
    %23 = sbr.rel (0) target = $region25
  $region24: #{mlp_forward.1} parent=0 // pred_region
    _
  $region25: #{mlp_forward.1} parent=0 // pred_fallthru
    _
  // Predicated region
  $region26: #{mlp_forward.1} parent=0 // pred_check
    _
  $region27: #{mlp_forward.1} parent=0 // pred_check_branch
    %25 = sbr.rel (0) target = $region29
  $region28: #{mlp_forward.1} parent=0 // pred_region
    _
  $region29: #{mlp_forward.1} parent=0 // pred_fallthru
    _
  %p26 = scmp.eq.s32.totalorder 0, 0
  // Predicated region
  $region30: #{mlp_forward.1} parent=0 // pred_check
    %p27 = pneg %p26
  $region31: #{mlp_forward.1} parent=0 // pred_check_branch
    %29 = sbr.rel (%p27) target = $region33
  $region32: #{mlp_forward.1} parent=0 // pred_region
    %v30 = vld [vmem:[%s0] sm:$0xff]
    %v31 = vld [vmem:[%s0 + $0x8] sm:$0xff]
    %v32 = vld [vmem:[%s0 + $0x10] sm:$0xff]
    %v33 = vld [vmem:[%s0 + $0x18] sm:$0xff]
    %v34 = vld [vmem:[%s0 + $0x20] sm:$0xff]
    %v35 = vld [vmem:[%s0 + $0x28] sm:$0xff]
    %v36 = vld [vmem:[%s0 + $0x30] sm:$0xff]
    %v37 = vld [vmem:[%s0 + $0x38] sm:$0xff]
    %v38 = vld [vmem:[%s0 + $0x40] sm:$0xff]
    %v39 = vld [vmem:[%s0 + $0x48] sm:$0xff]
    %v40 = vld [vmem:[%s0 + $0x50] sm:$0xff]
    %v41 = vld [vmem:[%s0 + $0x58] sm:$0xff]
    %v42 = vld [vmem:[%s0 + $0x60] sm:$0xff]
    %v43 = vld [vmem:[%s0 + $0x68] sm:$0xff]
    %v44 = vld [vmem:[%s0 + $0x70] sm:$0xff]
    %v45 = vld [vmem:[%s0 + $0x78] sm:$0xff]
    %v46 = vld [vmem:[%s0 + $0x80] sm:$0xff]
    %v47 = vld [vmem:[%s0 + $0x88] sm:$0xff]
    %v48 = vld [vmem:[%s0 + $0x90] sm:$0xff]
    %v49 = vld [vmem:[%s0 + $0x98] sm:$0xff]
    %v50 = vld [vmem:[%s0 + $0xa0] sm:$0xff]
    %v51 = vld [vmem:[%s0 + $0xa8] sm:$0xff]
    %v52 = vld [vmem:[%s0 + $0xb0] sm:$0xff]
    %v53 = vld [vmem:[%s0 + $0xb8] sm:$0xff]
    %v54 = vld [vmem:[%s0 + $0xc0] sm:$0xff]
    %v55 = vld [vmem:[%s0 + $0xc8] sm:$0xff]
    %v56 = vld [vmem:[%s0 + $0xd0] sm:$0xff]
    %v57 = vld [vmem:[%s0 + $0xd8] sm:$0xff]
    %v58 = vld [vmem:[%s0 + $0xe0] sm:$0xff]
    %v59 = vld [vmem:[%s0 + $0xe8] sm:$0xff]
    %v60 = vld [vmem:[%s0 + $0xf0] sm:$0xff]
    %v61 = vld [vmem:[%s0 + $0xf8] sm:$0xff]
    %vm62 = vcmask 261120
    %v63 = vsel %vm62, %v30, 0.0
    %64 = vadd.xlane.f32.xlu0 %v63
    %v65 = vpop.xlane.xlu0 %64
    %v66 = vsel %vm62, %v31, 0.0
    %67 = vadd.xlane.f32.xlu0 %v66
    %v68 = vpop.xlane.xlu0 %67
    %v69 = vsel %vm62, %v32, 0.0
    %70 = vadd.xlane.f32.xlu0 %v69
    %v71 = vpop.xlane.xlu0 %70
    %v72 = vsel %vm62, %v33, 0.0
    %73 = vadd.xlane.f32.xlu0 %v72
    %v74 = vpop.xlane.xlu0 %73
    %v75 = vsel %vm62, %v34, 0.0
    %76 = vadd.xlane.f32.xlu0 %v75
    %v77 = vpop.xlane.xlu0 %76
    %v78 = vsel %vm62, %v35, 0.0
    %79 = vadd.xlane.f32.xlu0 %v78
    %v80 = vpop.xlane.xlu0 %79
    %v81 = vsel %vm62, %v36, 0.0
    %82 = vadd.xlane.f32.xlu0 %v81
    %v83 = vpop.xlane.xlu0 %82
    %v84 = vsel %vm62, %v37, 0.0
    %85 = vadd.xlane.f32.xlu0 %v84
    %v86 = vpop.xlane.xlu0 %85
    %v87 = vsel %vm62, %v38, 0.0
    %88 = vadd.xlane.f32.xlu0 %v87
    %v89 = vpop.xlane.xlu0 %88
    %v90 = vsel %vm62, %v39, 0.0
    %91 = vadd.xlane.f32.xlu0 %v90
    %v92 = vpop.xlane.xlu0 %91
    %v93 = vsel %vm62, %v40, 0.0
    %94 = vadd.xlane.f32.xlu0 %v93
    %v95 = vpop.xlane.xlu0 %94
    %v96 = vsel %vm62, %v41, 0.0
    %97 = vadd.xlane.f32.xlu0 %v96
    %v98 = vpop.xlane.xlu0 %97
    %v99 = vsel %vm62, %v42, 0.0
    %100 = vadd.xlane.f32.xlu0 %v99
    %v101 = vpop.xlane.xlu0 %100
    %v102 = vsel %vm62, %v43, 0.0
    %103 = vadd.xlane.f32.xlu0 %v102
    %v104 = vpop.xlane.xlu0 %103
    %v105 = vsel %vm62, %v44, 0.0
    %106 = vadd.xlane.f32.xlu0 %v105
    %v107 = vpop.xlane.xlu0 %106
    %v108 = vsel %vm62, %v45, 0.0
    %109 = vadd.xlane.f32.xlu0 %v108
    %v110 = vpop.xlane.xlu0 %109
    %v111 = vsel %vm62, %v46, 0.0
    %112 = vadd.xlane.f32.xlu0 %v111
    %v113 = vpop.xlane.xlu0 %112
    %v114 = vsel %vm62, %v47, 0.0
    %115 = vadd.xlane.f32.xlu0 %v114
    %v116 = vpop.xlane.xlu0 %115
    %v117 = vsel %vm62, %v48, 0.0
    %118 = vadd.xlane.f32.xlu0 %v117
    %v119 = vpop.xlane.xlu0 %118
    %v120 = vsel %vm62, %v49, 0.0
    %121 = vadd.xlane.f32.xlu0 %v120
    %v122 = vpop.xlane.xlu0 %121
    %v123 = vsel %vm62, %v50, 0.0
    %124 = vadd.xlane.f32.xlu0 %v123
    %v125 = vpop.xlane.xlu0 %124
    %v126 = vsel %vm62, %v51, 0.0
    %127 = vadd.xlane.f32.xlu0 %v126
    %v128 = vpop.xlane.xlu0 %127
    %v129 = vsel %vm62, %v52, 0.0
    %130 = vadd.xlane.f32.xlu0 %v129
    %v131 = vpop.xlane.xlu0 %130
    %v132 = vsel %vm62, %v53, 0.0
    %133 = vadd.xlane.f32.xlu0 %v132
    %v134 = vpop.xlane.xlu0 %133
    %v135 = vsel %vm62, %v54, 0.0
    %136 = vadd.xlane.f32.xlu0 %v135
    %v137 = vpop.xlane.xlu0 %136
    %v138 = vsel %vm62, %v55, 0.0
    %139 = vadd.xlane.f32.xlu0 %v138
    %v140 = vpop.xlane.xlu0 %139
    %v141 = vsel %vm62, %v56, 0.0
    %142 = vadd.xlane.f32.xlu0 %v141
    %v143 = vpop.xlane.xlu0 %142
    %v144 = vsel %vm62, %v57, 0.0
    %145 = vadd.xlane.f32.xlu0 %v144
    %v146 = vpop.xlane.xlu0 %145
    %v147 = vsel %vm62, %v58, 0.0
    %148 = vadd.xlane.f32.xlu0 %v147
    %v149 = vpop.xlane.xlu0 %148
    %v150 = vsel %vm62, %v59, 0.0
    %151 = vadd.xlane.f32.xlu0 %v150
    %v152 = vpop.xlane.xlu0 %151
    %v153 = vsel %vm62, %v60, 0.0
    %154 = vadd.xlane.f32.xlu0 %v153
    %v155 = vpop.xlane.xlu0 %154
    %v156 = vsel %vm62, %v61, 0.0
    %157 = vadd.xlane.f32.xlu0 %v156
    %v158 = vpop.xlane.xlu0 %157
    %v159 = vmul.f32 %v30, %v30
    %v160 = vmul.f32 %v31, %v31
    %v161 = vmul.f32 %v32, %v32
    %v162 = vmul.f32 %v33, %v33
    %v163 = vmul.f32 %v34, %v34
    %v164 = vmul.f32 %v35, %v35
    %v165 = vmul.f32 %v36, %v36
    %v166 = vmul.f32 %v37, %v37
    %v167 = vmul.f32 %v38, %v38
    %v168 = vmul.f32 %v39, %v39
    %v169 = vmul.f32 %v40, %v40
    %v170 = vmul.f32 %v41, %v41
    %v171 = vmul.f32 %v42, %v42
    %v172 = vmul.f32 %v43, %v43
    %v173 = vmul.f32 %v44, %v44
    %v174 = vmul.f32 %v45, %v45
    %v175 = vmul.f32 %v46, %v46
    %v176 = vmul.f32 %v47, %v47
    %v177 = vmul.f32 %v48, %v48
    %v178 = vmul.f32 %v49, %v49
    %v179 = vmul.f32 %v50, %v50
    %v180 = vmul.f32 %v51, %v51
    %v181 = vmul.f32 %v52, %v52
    %v182 = vmul.f32 %v53, %v53
    %v183 = vmul.f32 %v54, %v54
    %v184 = vmul.f32 %v55, %v55
    %v185 = vmul.f32 %v56, %v56
    %v186 = vmul.f32 %v57, %v57
    %v187 = vmul.f32 %v58, %v58
    %v188 = vmul.f32 %v59, %v59
    %v189 = vmul.f32 %v60, %v60
    %v190 = vmul.f32 %v61, %v61
    %v191 = vsel %vm62, %v159, 0.0
    %192 = vadd.xlane.f32.xlu0 %v191
    %v193 = vpop.xlane.xlu0 %192
    %v194 = vsel %vm62, %v160, 0.0
    %195 = vadd.xlane.f32.xlu0 %v194
    %v196 = vpop.xlane.xlu0 %195
    %v197 = vsel %vm62, %v161, 0.0
    %198 = vadd.xlane.f32.xlu0 %v197
    %v199 = vpop.xlane.xlu0 %198
    %v200 = vsel %vm62, %v162, 0.0
    %201 = vadd.xlane.f32.xlu0 %v200
    %v202 = vpop.xlane.xlu0 %201
    %v203 = vsel %vm62, %v163, 0.0
    %204 = vadd.xlane.f32.xlu0 %v203
    %v205 = vpop.xlane.xlu0 %204
    %v206 = vsel %vm62, %v164, 0.0
    %207 = vadd.xlane.f32.xlu0 %v206
    %v208 = vpop.xlane.xlu0 %207
    %v209 = vsel %vm62, %v165, 0.0
    %210 = vadd.xlane.f32.xlu0 %v209
    %v211 = vpop.xlane.xlu0 %210
    %v212 = vsel %vm62, %v166, 0.0
    %213 = vadd.xlane.f32.xlu0 %v212
    %v214 = vpop.xlane.xlu0 %213
    %v215 = vsel %vm62, %v167, 0.0
    %216 = vadd.xlane.f32.xlu0 %v215
    %v217 = vpop.xlane.xlu0 %216
    %v218 = vsel %vm62, %v168, 0.0
    %219 = vadd.xlane.f32.xlu0 %v218
    %v220 = vpop.xlane.xlu0 %219
    %v221 = vsel %vm62, %v169, 0.0
    %222 = vadd.xlane.f32.xlu0 %v221
    %v223 = vpop.xlane.xlu0 %222
    %v224 = vsel %vm62, %v170, 0.0
    %225 = vadd.xlane.f32.xlu0 %v224
    %v226 = vpop.xlane.xlu0 %225
    %v227 = vsel %vm62, %v171, 0.0
    %228 = vadd.xlane.f32.xlu0 %v227
    %v229 = vpop.xlane.xlu0 %228
    %v230 = vsel %vm62, %v172, 0.0
    %231 = vadd.xlane.f32.xlu0 %v230
    %v232 = vpop.xlane.xlu0 %231
    %v233 = vsel %vm62, %v173, 0.0
    %234 = vadd.xlane.f32.xlu0 %v233
    %v235 = vpop.xlane.xlu0 %234
    %v236 = vsel %vm62, %v174, 0.0
    %237 = vadd.xlane.f32.xlu0 %v236
    %v238 = vpop.xlane.xlu0 %237
    %v239 = vsel %vm62, %v175, 0.0
    %240 = vadd.xlane.f32.xlu0 %v239
    %v241 = vpop.xlane.xlu0 %240
    %v242 = vsel %vm62, %v176, 0.0
    %243 = vadd.xlane.f32.xlu0 %v242
    %v244 = vpop.xlane.xlu0 %243
    %v245 = vsel %vm62, %v177, 0.0
    %246 = vadd.xlane.f32.xlu0 %v245
    %v247 = vpop.xlane.xlu0 %246
    %v248 = vsel %vm62, %v178, 0.0
    %249 = vadd.xlane.f32.xlu0 %v248
    %v250 = vpop.xlane.xlu0 %249
    %v251 = vsel %vm62, %v179, 0.0
    %252 = vadd.xlane.f32.xlu0 %v251
    %v253 = vpop.xlane.xlu0 %252
    %v254 = vsel %vm62, %v180, 0.0
    %255 = vadd.xlane.f32.xlu0 %v254
    %v256 = vpop.xlane.xlu0 %255
    %v257 = vsel %vm62, %v181, 0.0
    %258 = vadd.xlane.f32.xlu0 %v257
    %v259 = vpop.xlane.xlu0 %258
    %v260 = vsel %vm62, %v182, 0.0
    %261 = vadd.xlane.f32.xlu0 %v260
    %v262 = vpop.xlane.xlu0 %261
    %v263 = vsel %vm62, %v183, 0.0
    %264 = vadd.xlane.f32.xlu0 %v263
    %v265 = vpop.xlane.xlu0 %264
    %v266 = vsel %vm62, %v184, 0.0
    %267 = vadd.xlane.f32.xlu0 %v266
    %v268 = vpop.xlane.xlu0 %267
    %v269 = vsel %vm62, %v185, 0.0
    %270 = vadd.xlane.f32.xlu0 %v269
    %v271 = vpop.xlane.xlu0 %270
    %v272 = vsel %vm62, %v186, 0.0
    %273 = vadd.xlane.f32.xlu0 %v272
    %v274 = vpop.xlane.xlu0 %273
    %v275 = vsel %vm62, %v187, 0.0
    %276 = vadd.xlane.f32.xlu0 %v275
    %v277 = vpop.xlane.xlu0 %276
    %v278 = vsel %vm62, %v188, 0.0
    %279 = vadd.xlane.f32.xlu0 %v278
    %v280 = vpop.xlane.xlu0 %279
    %v281 = vsel %vm62, %v189, 0.0
    %282 = vadd.xlane.f32.xlu0 %v281
    %v283 = vpop.xlane.xlu0 %282
    %v284 = vsel %vm62, %v190, 0.0
    %285 = vadd.xlane.f32.xlu0 %v284
    %v286 = vpop.xlane.xlu0 %285
    %v287 = vmul.f32 %v65, 0.03125
    %v288 = vmul.f32 %v68, 0.03125
    %v289 = vmul.f32 %v71, 0.03125
    %v290 = vmul.f32 %v74, 0.03125
    %v291 = vmul.f32 %v77, 0.03125
    %v292 = vmul.f32 %v80, 0.03125
    %v293 = vmul.f32 %v83, 0.03125
    %v294 = vmul.f32 %v86, 0.03125
    %v295 = vmul.f32 %v89, 0.03125
    %v296 = vmul.f32 %v92, 0.03125
    %v297 = vmul.f32 %v95, 0.03125
    %v298 = vmul.f32 %v98, 0.03125
    %v299 = vmul.f32 %v101, 0.03125
    %v300 = vmul.f32 %v104, 0.03125
    %v301 = vmul.f32 %v107, 0.03125
    %v302 = vmul.f32 %v110, 0.03125
    %v303 = vmul.f32 %v113, 0.03125
    %v304 = vmul.f32 %v116, 0.03125
    %v305 = vmul.f32 %v119, 0.03125
    %v306 = vmul.f32 %v122, 0.03125
    %v307 = vmul.f32 %v125, 0.03125
    %v308 = vmul.f32 %v128, 0.03125
    %v309 = vmul.f32 %v131, 0.03125
    %v310 = vmul.f32 %v134, 0.03125
    %v311 = vmul.f32 %v137, 0.03125
    %v312 = vmul.f32 %v140, 0.03125
    %v313 = vmul.f32 %v143, 0.03125
    %v314 = vmul.f32 %v146, 0.03125
    %v315 = vmul.f32 %v149, 0.03125
    %v316 = vmul.f32 %v152, 0.03125
    %v317 = vmul.f32 %v155, 0.03125
    %v318 = vmul.f32 %v158, 0.03125
    %v319 = vmul.f32 %v193, 0.03125
    %v320 = vmul.f32 %v196, 0.03125
    %v321 = vmul.f32 %v199, 0.03125
    %v322 = vmul.f32 %v202, 0.03125
    %v323 = vmul.f32 %v205, 0.03125
    %v324 = vmul.f32 %v208, 0.03125
    %v325 = vmul.f32 %v211, 0.03125
    %v326 = vmul.f32 %v214, 0.03125
    %v327 = vmul.f32 %v217, 0.03125
    %v328 = vmul.f32 %v220, 0.03125
    %v329 = vmul.f32 %v223, 0.03125
    %v330 = vmul.f32 %v226, 0.03125
    %v331 = vmul.f32 %v229, 0.03125
    %v332 = vmul.f32 %v232, 0.03125
    %v333 = vmul.f32 %v235, 0.03125
    %v334 = vmul.f32 %v238, 0.03125
    %v335 = vmul.f32 %v241, 0.03125
    %v336 = vmul.f32 %v244, 0.03125
    %v337 = vmul.f32 %v247, 0.03125
    %v338 = vmul.f32 %v250, 0.03125
    %v339 = vmul.f32 %v253, 0.03125
    %v340 = vmul.f32 %v256, 0.03125
    %v341 = vmul.f32 %v259, 0.03125
    %v342 = vmul.f32 %v262, 0.03125
    %v343 = vmul.f32 %v265, 0.03125
    %v344 = vmul.f32 %v268, 0.03125
    %v345 = vmul.f32 %v271, 0.03125
    %v346 = vmul.f32 %v274, 0.03125
    %v347 = vmul.f32 %v277, 0.03125
    %v348 = vmul.f32 %v280, 0.03125
    %v349 = vmul.f32 %v283, 0.03125
    %v350 = vmul.f32 %v286, 0.03125
    %v351 = vmul.f32 %v287, %v287
    %v352 = vmul.f32 %v288, %v288
    %v353 = vmul.f32 %v289, %v289
    %v354 = vmul.f32 %v290, %v290
    %v355 = vmul.f32 %v291, %v291
    %v356 = vmul.f32 %v292, %v292
    %v357 = vmul.f32 %v293, %v293
    %v358 = vmul.f32 %v294, %v294
    %v359 = vmul.f32 %v295, %v295
    %v360 = vmul.f32 %v296, %v296
    %v361 = vmul.f32 %v297, %v297
    %v362 = vmul.f32 %v298, %v298
    %v363 = vmul.f32 %v299, %v299
    %v364 = vmul.f32 %v300, %v300
    %v365 = vmul.f32 %v301, %v301
    %v366 = vmul.f32 %v302, %v302
    %v367 = vmul.f32 %v303, %v303
    %v368 = vmul.f32 %v304, %v304
    %v369 = vmul.f32 %v305, %v305
    %v370 = vmul.f32 %v306, %v306
    %v371 = vmul.f32 %v307, %v307
    %v372 = vmul.f32 %v308, %v308
    %v373 = vmul.f32 %v309, %v309
    %v374 = vmul.f32 %v310, %v310
    %v375 = vmul.f32 %v311, %v311
    %v376 = vmul.f32 %v312, %v312
    %v377 = vmul.f32 %v313, %v313
    %v378 = vmul.f32 %v314, %v314
    %v379 = vmul.f32 %v315, %v315
    %v380 = vmul.f32 %v316, %v316
    %v381 = vmul.f32 %v317, %v317
    %v382 = vmul.f32 %v318, %v318
    %v383 = vsub.f32 %v319, %v351
    %v384 = vsub.f32 %v320, %v352
    %v385 = vsub.f32 %v321, %v353
    %v386 = vsub.f32 %v322, %v354
    %v387 = vsub.f32 %v323, %v355
    %v388 = vsub.f32 %v324, %v356
    %v389 = vsub.f32 %v325, %v357
    %v390 = vsub.f32 %v326, %v358
    %v391 = vsub.f32 %v327, %v359
    %v392 = vsub.f32 %v328, %v360
    %v393 = vsub.f32 %v329, %v361
    %v394 = vsub.f32 %v330, %v362
    %v395 = vsub.f32 %v331, %v363
    %v396 = vsub.f32 %v332, %v364
    %v397 = vsub.f32 %v333, %v365
    %v398 = vsub.f32 %v334, %v366
    %v399 = vsub.f32 %v335, %v367
    %v400 = vsub.f32 %v336, %v368
    %v401 = vsub.f32 %v337, %v369
    %v402 = vsub.f32 %v338, %v370
    %v403 = vsub.f32 %v339, %v371
    %v404 = vsub.f32 %v340, %v372
    %v405 = vsub.f32 %v341, %v373
    %v406 = vsub.f32 %v342, %v374
    %v407 = vsub.f32 %v343, %v375
    %v408 = vsub.f32 %v344, %v376
    %v409 = vsub.f32 %v345, %v377
    %v410 = vsub.f32 %v346, %v378
    %v411 = vsub.f32 %v347, %v379
    %v412 = vsub.f32 %v348, %v380
    %v413 = vsub.f32 %v349, %v381
    %v414 = vsub.f32 %v350, %v382
    %v415 = vmax.f32 %v383, 0.0
    %v416 = vmax.f32 %v384, 0.0
    %v417 = vmax.f32 %v385, 0.0
    %v418 = vmax.f32 %v386, 0.0
    %v419 = vmax.f32 %v387, 0.0
    %v420 = vmax.f32 %v388, 0.0
    %v421 = vmax.f32 %v389, 0.0
    %v422 = vmax.f32 %v390, 0.0
    %v423 = vmax.f32 %v391, 0.0
    %v424 = vmax.f32 %v392, 0.0
    %v425 = vmax.f32 %v393, 0.0
    %v426 = vmax.f32 %v394, 0.0
    %v427 = vmax.f32 %v395, 0.0
    %v428 = vmax.f32 %v396, 0.0
    %v429 = vmax.f32 %v397, 0.0
    %v430 = vmax.f32 %v398, 0.0
    %v431 = vmax.f32 %v399, 0.0
    %v432 = vmax.f32 %v400, 0.0
    %v433 = vmax.f32 %v401, 0.0
    %v434 = vmax.f32 %v402, 0.0
    %v435 = vmax.f32 %v403, 0.0
    %v436 = vmax.f32 %v404, 0.0
    %v437 = vmax.f32 %v405, 0.0
    %v438 = vmax.f32 %v406, 0.0
    %v439 = vmax.f32 %v407, 0.0
    %v440 = vmax.f32 %v408, 0.0
    %v441 = vmax.f32 %v409, 0.0
    %v442 = vmax.f32 %v410, 0.0
    %v443 = vmax.f32 %v411, 0.0
    %v444 = vmax.f32 %v412, 0.0
    %v445 = vmax.f32 %v413, 0.0
    %v446 = vmax.f32 %v414, 0.0
    %v447 = vsub.f32 %v30, %v287
    %v448 = vsub.f32 %v31, %v288
    %v449 = vsub.f32 %v32, %v289
    %v450 = vsub.f32 %v33, %v290
    %v451 = vsub.f32 %v34, %v291
    %v452 = vsub.f32 %v35, %v292
    %v453 = vsub.f32 %v36, %v293
    %v454 = vsub.f32 %v37, %v294
    %v455 = vsub.f32 %v38, %v295
    %v456 = vsub.f32 %v39, %v296
    %v457 = vsub.f32 %v40, %v297
    %v458 = vsub.f32 %v41, %v298
    %v459 = vsub.f32 %v42, %v299
    %v460 = vsub.f32 %v43, %v300
    %v461 = vsub.f32 %v44, %v301
    %v462 = vsub.f32 %v45, %v302
    %v463 = vsub.f32 %v46, %v303
    %v464 = vsub.f32 %v47, %v304
    %v465 = vsub.f32 %v48, %v305
    %v466 = vsub.f32 %v49, %v306
    %v467 = vsub.f32 %v50, %v307
    %v468 = vsub.f32 %v51, %v308
    %v469 = vsub.f32 %v52, %v309
    %v470 = vsub.f32 %v53, %v310
    %v471 = vsub.f32 %v54, %v311
    %v472 = vsub.f32 %v55, %v312
    %v473 = vsub.f32 %v56, %v313
    %v474 = vsub.f32 %v57, %v314
    %v475 = vsub.f32 %v58, %v315
    %v476 = vsub.f32 %v59, %v316
    %v477 = vsub.f32 %v60, %v317
    %v478 = vsub.f32 %v61, %v318
    %v479 = vadd.f32 %v415, 1e-05
    %v480 = vadd.f32 %v416, 1e-05
    %v481 = vadd.f32 %v417, 1e-05
    %v482 = vadd.f32 %v418, 1e-05
    %v483 = vadd.f32 %v419, 1e-05
    %v484 = vadd.f32 %v420, 1e-05
    %v485 = vadd.f32 %v421, 1e-05
    %v486 = vadd.f32 %v422, 1e-05
    %v487 = vadd.f32 %v423, 1e-05
    %v488 = vadd.f32 %v424, 1e-05
    %v489 = vadd.f32 %v425, 1e-05
    %v490 = vadd.f32 %v426, 1e-05
    %v491 = vadd.f32 %v427, 1e-05
    %v492 = vadd.f32 %v428, 1e-05
    %v493 = vadd.f32 %v429, 1e-05
    %v494 = vadd.f32 %v430, 1e-05
    %v495 = vadd.f32 %v431, 1e-05
    %v496 = vadd.f32 %v432, 1e-05
    %v497 = vadd.f32 %v433, 1e-05
    %v498 = vadd.f32 %v434, 1e-05
    %v499 = vadd.f32 %v435, 1e-05
    %v500 = vadd.f32 %v436, 1e-05
    %v501 = vadd.f32 %v437, 1e-05
    %v502 = vadd.f32 %v438, 1e-05
    %v503 = vadd.f32 %v439, 1e-05
    %v504 = vadd.f32 %v440, 1e-05
    %v505 = vadd.f32 %v441, 1e-05
    %v506 = vadd.f32 %v442, 1e-05
    %v507 = vadd.f32 %v443, 1e-05
    %v508 = vadd.f32 %v444, 1e-05
    %v509 = vadd.f32 %v445, 1e-05
    %v510 = vadd.f32 %v446, 1e-05
    %v511 = vrsqrt.pop %v479
    %v512 = vrsqrt.pop %v480
    %v513 = vrsqrt.pop %v481
    %v514 = vrsqrt.pop %v482
    %v515 = vrsqrt.pop %v483
    %v516 = vrsqrt.pop %v484
    %v517 = vrsqrt.pop %v485
    %v518 = vrsqrt.pop %v486
    %v519 = vrsqrt.pop %v487
    %v520 = vrsqrt.pop %v488
    %v521 = vrsqrt.pop %v489
    %v522 = vrsqrt.pop %v490
    %v523 = vrsqrt.pop %v491
    %v524 = vrsqrt.pop %v492
    %v525 = vrsqrt.pop %v493
    %v526 = vrsqrt.pop %v494
    %v527 = vrsqrt.pop %v495
    %v528 = vrsqrt.pop %v496
    %v529 = vrsqrt.pop %v497
    %v530 = vrsqrt.pop %v498
    %v531 = vrsqrt.pop %v499
    %v532 = vrsqrt.pop %v500
    %v533 = vrsqrt.pop %v501
    %v534 = vrsqrt.pop %v502
    %v535 = vrsqrt.pop %v503
    %v536 = vrsqrt.pop %v504
    %v537 = vrsqrt.pop %v505
    %v538 = vrsqrt.pop %v506
    %v539 = vrsqrt.pop %v507
    %v540 = vrsqrt.pop %v508
    %v541 = vrsqrt.pop %v509
    %v542 = vrsqrt.pop %v510
    %v543 = vmul.f32 %v447, %v511
    %v544 = vmul.f32 %v448, %v512
    %v545 = vmul.f32 %v449, %v513
    %v546 = vmul.f32 %v450, %v514
    %v547 = vmul.f32 %v451, %v515
    %v548 = vmul.f32 %v452, %v516
    %v549 = vmul.f32 %v453, %v517
    %v550 = vmul.f32 %v454, %v518
    %v551 = vmul.f32 %v455, %v519
    %v552 = vmul.f32 %v456, %v520
    %v553 = vmul.f32 %v457, %v521
    %v554 = vmul.f32 %v458, %v522
    %v555 = vmul.f32 %v459, %v523
    %v556 = vmul.f32 %v460, %v524
    %v557 = vmul.f32 %v461, %v525
    %v558 = vmul.f32 %v462, %v526
    %v559 = vmul.f32 %v463, %v527
    %v560 = vmul.f32 %v464, %v528
    %v561 = vmul.f32 %v465, %v529
    %v562 = vmul.f32 %v466, %v530
    %v563 = vmul.f32 %v467, %v531
    %v564 = vmul.f32 %v468, %v532
    %v565 = vmul.f32 %v469, %v533
    %v566 = vmul.f32 %v470, %v534
    %v567 = vmul.f32 %v471, %v535
    %v568 = vmul.f32 %v472, %v536
    %v569 = vmul.f32 %v473, %v537
    %v570 = vmul.f32 %v474, %v538
    %v571 = vmul.f32 %v475, %v539
    %v572 = vmul.f32 %v476, %v540
    %v573 = vmul.f32 %v477, %v541
    %v574 = vmul.f32 %v478, %v542
    %v575 = vld [vmem:[%s1] sm:$0x1]
    %v577 = vlaneseq
    %v578 = vshrl.u32 %v577, 7
    %v579 = vsub.s32 0, %v578
    %v580 = vrot.slane %v575, %v579
    %v582 = vmul.f32 %v543, %v580
    %v583 = vmul.f32 %v544, %v580
    %v584 = vmul.f32 %v545, %v580
    %v585 = vmul.f32 %v546, %v580
    %v586 = vmul.f32 %v547, %v580
    %v587 = vmul.f32 %v548, %v580
    %v588 = vmul.f32 %v549, %v580
    %v589 = vmul.f32 %v550, %v580
    %v590 = vmul.f32 %v551, %v580
    %v591 = vmul.f32 %v552, %v580
    %v592 = vmul.f32 %v553, %v580
    %v593 = vmul.f32 %v554, %v580
    %v594 = vmul.f32 %v555, %v580
    %v595 = vmul.f32 %v556, %v580
    %v596 = vmul.f32 %v557, %v580
    %v597 = vmul.f32 %v558, %v580
    %v598 = vmul.f32 %v559, %v580
    %v599 = vmul.f32 %v560, %v580
    %v600 = vmul.f32 %v561, %v580
    %v601 = vmul.f32 %v562, %v580
    %v602 = vmul.f32 %v563, %v580
    %v603 = vmul.f32 %v564, %v580
    %v604 = vmul.f32 %v565, %v580
    %v605 = vmul.f32 %v566, %v580
    %v606 = vmul.f32 %v567, %v580
    %v607 = vmul.f32 %v568, %v580
    %v608 = vmul.f32 %v569, %v580
    %v609 = vmul.f32 %v570, %v580
    %v610 = vmul.f32 %v571, %v580
    %v611 = vmul.f32 %v572, %v580
    %v612 = vmul.f32 %v573, %v580
    %v613 = vmul.f32 %v574, %v580
    %v614 = vld [vmem:[%s2] sm:$0x1]
    %v616 = vlaneseq
    %v617 = vshrl.u32 %v616, 7
    %v618 = vsub.s32 0, %v617
    %v619 = vrot.slane %v614, %v618
    %v621 = vadd.f32 %v582, %v619
    %v622 = vadd.f32 %v583, %v619
    %v623 = vadd.f32 %v584, %v619
    %v624 = vadd.f32 %v585, %v619
    %v625 = vadd.f32 %v586, %v619
    %v626 = vadd.f32 %v587, %v619
    %v627 = vadd.f32 %v588, %v619
    %v628 = vadd.f32 %v589, %v619
    %v629 = vadd.f32 %v590, %v619
    %v630 = vadd.f32 %v591, %v619
    %v631 = vadd.f32 %v592, %v619
    %v632 = vadd.f32 %v593, %v619
    %v633 = vadd.f32 %v594, %v619
    %v634 = vadd.f32 %v595, %v619
    %v635 = vadd.f32 %v596, %v619
    %v636 = vadd.f32 %v597, %v619
    %v637 = vadd.f32 %v598, %v619
    %v638 = vadd.f32 %v599, %v619
    %v639 = vadd.f32 %v600, %v619
    %v640 = vadd.f32 %v601, %v619
    %v641 = vadd.f32 %v602, %v619
    %v642 = vadd.f32 %v603, %v619
    %v643 = vadd.f32 %v604, %v619
    %v644 = vadd.f32 %v605, %v619
    %v645 = vadd.f32 %v606, %v619
    %v646 = vadd.f32 %v607, %v619
    %v647 = vadd.f32 %v608, %v619
    %v648 = vadd.f32 %v609, %v619
    %v649 = vadd.f32 %v610, %v619
    %v650 = vadd.f32 %v611, %v619
    %v651 = vadd.f32 %v612, %v619
    %v652 = vadd.f32 %v613, %v619
    %653 = vst.msk [vmem:[#allocation2] sm:$0xff] %vm62, %v621
    %654 = vst.msk [vmem:[#allocation2 + $0x8] sm:$0xff] %vm62, %v622
    %655 = vst.msk [vmem:[#allocation2 + $0x10] sm:$0xff] %vm62, %v623
    %656 = vst.msk [vmem:[#allocation2 + $0x18] sm:$0xff] %vm62, %v624
    %657 = vst.msk [vmem:[#allocation2 + $0x20] sm:$0xff] %vm62, %v625
    %658 = vst.msk [vmem:[#allocation2 + $0x28] sm:$0xff] %vm62, %v626
    %659 = vst.msk [vmem:[#allocation2 + $0x30] sm:$0xff] %vm62, %v627
    %660 = vst.msk [vmem:[#allocation2 + $0x38] sm:$0xff] %vm62, %v628
    %661 = vst.msk [vmem:[#allocation2 + $0x40] sm:$0xff] %vm62, %v629
    %662 = vst.msk [vmem:[#allocation2 + $0x48] sm:$0xff] %vm62, %v630
    %663 = vst.msk [vmem:[#allocation2 + $0x50] sm:$0xff] %vm62, %v631
    %664 = vst.msk [vmem:[#allocation2 + $0x58] sm:$0xff] %vm62, %v632
    %665 = vst.msk [vmem:[#allocation2 + $0x60] sm:$0xff] %vm62, %v633
    %666 = vst.msk [vmem:[#allocation2 + $0x68] sm:$0xff] %vm62, %v634
    %667 = vst.msk [vmem:[#allocation2 + $0x70] sm:$0xff] %vm62, %v635
    %668 = vst.msk [vmem:[#allocation2 + $0x78] sm:$0xff] %vm62, %v636
    %669 = vst.msk [vmem:[#allocation2 + $0x80] sm:$0xff] %vm62, %v637
    %670 = vst.msk [vmem:[#allocation2 + $0x88] sm:$0xff] %vm62, %v638
    %671 = vst.msk [vmem:[#allocation2 + $0x90] sm:$0xff] %vm62, %v639
    %672 = vst.msk [vmem:[#allocation2 + $0x98] sm:$0xff] %vm62, %v640
    %673 = vst.msk [vmem:[#allocation2 + $0xa0] sm:$0xff] %vm62, %v641
    %674 = vst.msk [vmem:[#allocation2 + $0xa8] sm:$0xff] %vm62, %v642
    %675 = vst.msk [vmem:[#allocation2 + $0xb0] sm:$0xff] %vm62, %v643
    %676 = vst.msk [vmem:[#allocation2 + $0xb8] sm:$0xff] %vm62, %v644
    %677 = vst.msk [vmem:[#allocation2 + $0xc0] sm:$0xff] %vm62, %v645
    %678 = vst.msk [vmem:[#allocation2 + $0xc8] sm:$0xff] %vm62, %v646
    %679 = vst.msk [vmem:[#allocation2 + $0xd0] sm:$0xff] %vm62, %v647
    %680 = vst.msk [vmem:[#allocation2 + $0xd8] sm:$0xff] %vm62, %v648
    %681 = vst.msk [vmem:[#allocation2 + $0xe0] sm:$0xff] %vm62, %v649
    %682 = vst.msk [vmem:[#allocation2 + $0xe8] sm:$0xff] %vm62, %v650
    %683 = vst.msk [vmem:[#allocation2 + $0xf0] sm:$0xff] %vm62, %v651
    %684 = vst.msk [vmem:[#allocation2 + $0xf8] sm:$0xff] %vm62, %v652
    %vm685 = vcmask 130048
    %686 = vst.msk [vmem:[#allocation3] sm:$0xff] %vm685, 0.0
    %687 = vst.msk [vmem:[#allocation3 + $0x8] sm:$0xff] %vm685, 0.0
    %688 = vst.msk [vmem:[#allocation3 + $0x10] sm:$0xff] %vm685, 0.0
    %689 = vst.msk [vmem:[#allocation3 + $0x18] sm:$0xff] %vm685, 0.0
    %690 = vst.msk [vmem:[#allocation3 + $0x20] sm:$0xff] %vm685, 0.0
    %691 = vst.msk [vmem:[#allocation3 + $0x28] sm:$0xff] %vm685, 0.0
    %692 = vst.msk [vmem:[#allocation3 + $0x30] sm:$0xff] %vm685, 0.0
    %693 = vst.msk [vmem:[#allocation3 + $0x38] sm:$0xff] %vm685, 0.0
    %694 = vst.msk [vmem:[#allocation3 + $0x40] sm:$0xff] %vm685, 0.0
    %695 = vst.msk [vmem:[#allocation3 + $0x48] sm:$0xff] %vm685, 0.0
    %696 = vst.msk [vmem:[#allocation3 + $0x50] sm:$0xff] %vm685, 0.0
    %697 = vst.msk [vmem:[#allocation3 + $0x58] sm:$0xff] %vm685, 0.0
    %698 = vst.msk [vmem:[#allocation3 + $0x60] sm:$0xff] %vm685, 0.0
    %699 = vst.msk [vmem:[#allocation3 + $0x68] sm:$0xff] %vm685, 0.0
    %700 = vst.msk [vmem:[#allocation3 + $0x70] sm:$0xff] %vm685, 0.0
    %701 = vst.msk [vmem:[#allocation3 + $0x78] sm:$0xff] %vm685, 0.0
    %702 = vst.msk [vmem:[#allocation3 + $0x80] sm:$0xff] %vm685, 0.0
    %703 = vst.msk [vmem:[#allocation3 + $0x88] sm:$0xff] %vm685, 0.0
    %704 = vst.msk [vmem:[#allocation3 + $0x90] sm:$0xff] %vm685, 0.0
    %705 = vst.msk [vmem:[#allocation3 + $0x98] sm:$0xff] %vm685, 0.0
    %706 = vst.msk [vmem:[#allocation3 + $0xa0] sm:$0xff] %vm685, 0.0
    %707 = vst.msk [vmem:[#allocation3 + $0xa8] sm:$0xff] %vm685, 0.0
    %708 = vst.msk [vmem:[#allocation3 + $0xb0] sm:$0xff] %vm685, 0.0
    %709 = vst.msk [vmem:[#allocation3 + $0xb8] sm:$0xff] %vm685, 0.0
    %710 = vst.msk [vmem:[#allocation3 + $0xc0] sm:$0xff] %vm685, 0.0
    %711 = vst.msk [vmem:[#allocation3 + $0xc8] sm:$0xff] %vm685, 0.0
    %712 = vst.msk [vmem:[#allocation3 + $0xd0] sm:$0xff] %vm685, 0.0
    %713 = vst.msk [vmem:[#allocation3 + $0xd8] sm:$0xff] %vm685, 0.0
    %714 = vst.msk [vmem:[#allocation3 + $0xe0] sm:$0xff] %vm685, 0.0
    %715 = vst.msk [vmem:[#allocation3 + $0xe8] sm:$0xff] %vm685, 0.0
    %716 = vst.msk [vmem:[#allocation3 + $0xf0] sm:$0xff] %vm685, 0.0
    %717 = vst.msk [vmem:[#allocation3 + $0xf8] sm:$0xff] %vm685, 0.0
  $region33: #{mlp_forward.1} parent=0 // pred_fallthru
    _
  %v718 = vld [vmem:[#allocation2] sm:$0xff]
  %v719 = vld [vmem:[#allocation2 + $0x8] sm:$0xff]
  %v720 = vld [vmem:[#allocation2 + $0x10] sm:$0xff]
  %v721 = vld [vmem:[#allocation2 + $0x18] sm:$0xff]
  %v722 = vld [vmem:[#allocation2 + $0x20] sm:$0xff]
  %v723 = vld [vmem:[#allocation2 + $0x28] sm:$0xff]
  %v724 = vld [vmem:[#allocation2 + $0x30] sm:$0xff]
  %v725 = vld [vmem:[#allocation2 + $0x38] sm:$0xff]
  %v726 = vld [vmem:[#allocation2 + $0x40] sm:$0xff]
  %v727 = vld [vmem:[#allocation2 + $0x48] sm:$0xff]
  %v728 = vld [vmem:[#allocation2 + $0x50] sm:$0xff]
  %v729 = vld [vmem:[#allocation2 + $0x58] sm:$0xff]
  %v730 = vld [vmem:[#allocation2 + $0x60] sm:$0xff]
  %v731 = vld [vmem:[#allocation2 + $0x68] sm:$0xff]
  %v732 = vld [vmem:[#allocation2 + $0x70] sm:$0xff]
  %v733 = vld [vmem:[#allocation2 + $0x78] sm:$0xff]
  %v734 = vld [vmem:[#allocation2 + $0x80] sm:$0xff]
  %v735 = vld [vmem:[#allocation2 + $0x88] sm:$0xff]
  %v736 = vld [vmem:[#allocation2 + $0x90] sm:$0xff]
  %v737 = vld [vmem:[#allocation2 + $0x98] sm:$0xff]
  %v738 = vld [vmem:[#allocation2 + $0xa0] sm:$0xff]
  %v739 = vld [vmem:[#allocation2 + $0xa8] sm:$0xff]
  %v740 = vld [vmem:[#allocation2 + $0xb0] sm:$0xff]
  %v741 = vld [vmem:[#allocation2 + $0xb8] sm:$0xff]
  %v742 = vld [vmem:[#allocation2 + $0xc0] sm:$0xff]
  %v743 = vld [vmem:[#allocation2 + $0xc8] sm:$0xff]
  %v744 = vld [vmem:[#allocation2 + $0xd0] sm:$0xff]
  %v745 = vld [vmem:[#allocation2 + $0xd8] sm:$0xff]
  %v746 = vld [vmem:[#allocation2 + $0xe0] sm:$0xff]
  %v747 = vld [vmem:[#allocation2 + $0xe8] sm:$0xff]
  %v748 = vld [vmem:[#allocation2 + $0xf0] sm:$0xff]
  %v749 = vld [vmem:[#allocation2 + $0xf8] sm:$0xff]
  %v750 = vld [vmem:[%s3] sm:$0xff]
  %v751 = vld [vmem:[%s3 + $0x8] sm:$0xff]
  %v752 = vld [vmem:[%s3 + $0x10] sm:$0xff]
  %v753 = vld [vmem:[%s3 + $0x18] sm:$0xff]
  %v754 = vld [vmem:[%s3 + $0x20] sm:$0xff]
  %v755 = vld [vmem:[%s3 + $0x28] sm:$0xff]
  %v756 = vld [vmem:[%s3 + $0x30] sm:$0xff]
  %v757 = vld [vmem:[%s3 + $0x38] sm:$0xff]
  %v758 = vld [vmem:[%s3 + $0x40] sm:$0xff]
  %v759 = vld [vmem:[%s3 + $0x48] sm:$0xff]
  %v760 = vld [vmem:[%s3 + $0x50] sm:$0xff]
  %v761 = vld [vmem:[%s3 + $0x58] sm:$0xff]
  %v762 = vld [vmem:[%s3 + $0x60] sm:$0xff]
  %v763 = vld [vmem:[%s3 + $0x68] sm:$0xff]
  %v764 = vld [vmem:[%s3 + $0x70] sm:$0xff]
  %v765 = vld [vmem:[%s3 + $0x78] sm:$0xff]
  %v766 = vld [vmem:[%s4] sm:$0xf]
  %v768 = vlaneseq
  %v769 = vshrl.u32 %v768, 7
  %v770 = vsub.s32 0, %v769
  %v771 = vrot.slane %v766, %v770
  %v772 = vlaneseq
  %v773 = vshrl.u32 %v772, 7
  %v774 = vsub.s32 1, %v773
  %v775 = vrot.slane %v766, %v774
  %v776 = vlaneseq
  %v777 = vshrl.u32 %v776, 7
  %v778 = vsub.s32 2, %v777
  %v779 = vrot.slane %v766, %v778
  %v780 = vlaneseq
  %v781 = vshrl.u32 %v780, 7
  %v782 = vsub.s32 3, %v781
  %v783 = vrot.slane %v766, %v782
  %vm788 = vcmask 261120
  %v790 = vsel %vm788, %v718, 0
  %v793 = vsel %vm788, %v719, 0
  %v796 = vsel %vm788, %v720, 0
  %v799 = vsel %vm788, %v721, 0
  %v802 = vsel %vm788, %v722, 0
  %v805 = vsel %vm788, %v723, 0
  %v808 = vsel %vm788, %v724, 0
  %v811 = vsel %vm788, %v725, 0
  %v814 = vsel %vm788, %v726, 0
  %v817 = vsel %vm788, %v727, 0
  %v820 = vsel %vm788, %v728, 0
  %v823 = vsel %vm788, %v729, 0
  %v826 = vsel %vm788, %v730, 0
  %v829 = vsel %vm788, %v731, 0
  %v832 = vsel %vm788, %v732, 0
  %v835 = vsel %vm788, %v733, 0
  %v838 = vsel %vm788, %v734, 0
  %v841 = vsel %vm788, %v735, 0
  %v844 = vsel %vm788, %v736, 0
  %v847 = vsel %vm788, %v737, 0
  %v850 = vsel %vm788, %v738, 0
  %v853 = vsel %vm788, %v739, 0
  %v856 = vsel %vm788, %v740, 0
  %v859 = vsel %vm788, %v741, 0
  %v862 = vsel %vm788, %v742, 0
  %v865 = vsel %vm788, %v743, 0
  %v868 = vsel %vm788, %v744, 0
  %v871 = vsel %vm788, %v745, 0
  %v874 = vsel %vm788, %v746, 0
  %v877 = vsel %vm788, %v747, 0
  %v880 = vsel %vm788, %v748, 0
  %v883 = vsel %vm788, %v749, 0
  %885 = vmatprep.subr.mxu0 %v751
  %886 = vmatpush1.msra.mxu0 %v750
  %887 = vmatprep.subr.mxu0 %v755
  %888 = vmatpush1.msra.mxu0 %v754
  %889 = vmatprep.subr.mxu0 %v759
  %890 = vmatpush1.msra.mxu0 %v758
  %891 = vmatprep.subr.mxu0 %v763
  %892 = vmatpush1.msra.mxu0 %v762
  %893 = vmatprep.subr.mxu0 0.0
  %894 = vmatpush1.msra.mxu0 0.0
  %895 = vmatprep.subr.mxu0 0.0
  %896 = vmatpush1.msra.mxu0 0.0
  %897 = vmatprep.subr.mxu0 0.0
  %898 = vmatpush1.msra.mxu0 0.0
  %899 = vmatprep.subr.mxu0 0.0
  %900 = vmatpush1.msra.mxu0 0.0
  %901 = vmatprep.subr.mxu0 0.0
  %902 = vmatpush1.msra.mxu0 0.0
  %903 = vmatprep.subr.mxu0 0.0
  %904 = vmatpush1.msra.mxu0 0.0
  %905 = vmatprep.subr.mxu0 0.0
  %906 = vmatpush1.msra.mxu0 0.0
  %907 = vmatprep.subr.mxu0 0.0
  %908 = vmatpush1.msra.mxu0 0.0
  %909 = vmatprep.subr.mxu0 0.0
  %910 = vmatpush1.msra.mxu0 0.0
  %911 = vmatprep.subr.mxu0 0.0
  %912 = vmatpush1.msra.mxu0 0.0
  %913 = vmatprep.subr.mxu0 0.0
  %914 = vmatpush1.msra.mxu0 0.0
  %915 = vmatprep.subr.mxu0 0.0
  %916 = vmatpush1.msra.mxu0 0.0
  %917 = vmatprep.subr.mxu0 0.0
  %918 = vmatpush1.msra.mxu0 0.0
  %919 = vmatprep.subr.mxu0 0.0
  %920 = vmatpush1.msra.mxu0 0.0
  %921 = vmatprep.subr.mxu0 0.0
  %922 = vmatpush1.msra.mxu0 0.0
  %923 = vmatprep.subr.mxu0 0.0
  %924 = vmatpush1.msra.mxu0 0.0
  %925 = vmatprep.subr.mxu0 0.0
  %926 = vmatpush1.msra.mxu0 0.0
  %927 = vmatprep.subr.mxu0 0.0
  %928 = vmatpush1.msra.mxu0 0.0
  %929 = vmatprep.subr.mxu0 0.0
  %930 = vmatpush1.msra.mxu0 0.0
  %931 = vmatprep.subr.mxu0 0.0
  %932 = vmatpush1.msra.mxu0 0.0
  %933 = vmatprep.subr.mxu0 0.0
  %934 = vmatpush1.msra.mxu0 0.0
  %935 = vmatprep.subr.mxu0 0.0
  %936 = vmatpush1.msra.mxu0 0.0
  %937 = vmatprep.subr.mxu0 0.0
  %938 = vmatpush1.msra.mxu0 0.0
  %939 = vmatprep.subr.mxu0 0.0
  %940 = vmatpush1.msra.mxu0 0.0
  %941 = vmatprep.subr.mxu0 0.0
  %942 = vmatpush1.msra.mxu0 0.0
  %943 = vmatprep.subr.mxu0 0.0
  %944 = vmatpush1.msra.mxu0 0.0
  %945 = vmatprep.subr.mxu0 0.0
  %946 = vmatpush1.msra.mxu0 0.0
  %947 = vmatprep.subr.mxu0 0.0
  %948 = vmatpush1.msra.mxu0 0.0
  %949 = vmatprep.mubr.f32.mxu0 0.0
  %950 = vmatmul.mubr.f32.gmra.mrb[0].mxu0 %v790
  %v951 = vpop.f32.mrb[0].mxu0
  %v952 = vadd.f32 %v771, %v951
  %v953 = vpop.f32.mrb[0].mxu0
  %v954 = vadd.f32 %v775, %v953
  %955 = vmatprep.mubr.f32.mxu0 0.0
  %956 = vmatmul.mubr.f32.gmra.mrb[0].mxu0 %v793
  %v957 = vpop.f32.mrb[0].mxu0
  %v958 = vadd.f32 %v771, %v957
  %v959 = vpop.f32.mrb[0].mxu0
  %v960 = vadd.f32 %v775, %v959
  %961 = vmatprep.mubr.f32.mxu0 0.0
  %962 = vmatmul.mubr.f32.gmra.mrb[0].mxu0 %v796
  %v963 = vpop.f32.mrb[0].mxu0
  %v964 = vadd.f32 %v771, %v963
  %v965 = vpop.f32.mrb[0].mxu0
  %v966 = vadd.f32 %v775, %v965
  %967 = vmatprep.mubr.f32.mxu0 0.0
  %968 = vmatmul.mubr.f32.gmra.mrb[0].mxu0 %v799
  %v969 = vpop.f32.mrb[0].mxu0
  %v970 = vadd.f32 %v771, %v969
  %v971 = vpop.f32.mrb[0].mxu0
  %v972 = vadd.f32 %v775, %v971
  %973 = vmatprep.mubr.f32.mxu0 0.0
  %974 = vmatmul.mubr.f32.gmra.mrb[0].mxu0 %v802
  %v975 = vpop.f32.mrb[0].mxu0
  %v976 = vadd.f32 %v771, %v975
  %v977 = vpop.f32.mrb[0].mxu0
  %v978 = vadd.f32 %v775, %v977
  %979 = vmatprep.mubr.f32.mxu0 0.0
  %980 = vmatmul.mubr.f32.gmra.mrb[0].mxu0 %v805
  %v981 = vpop.f32.mrb[0].mxu0
  %v982 = vadd.f32 %v771, %v981
  %v983 = vpop.f32.mrb[0].mxu0
  %v984 = vadd.f32 %v775, %v983
  %985 = vmatprep.mubr.f32.mxu0 0.0
  %986 = vmatmul.mubr.f32.gmra.mrb[0].mxu0 %v808
  %v987 = vpop.f32.mrb[0].mxu0
  %v988 = vadd.f32 %v771, %v987
  %v989 = vpop.f32.mrb[0].mxu0
  %v990 = vadd.f32 %v775, %v989
  %991 = vmatprep.mubr.f32.mxu0 0.0
  %992 = vmatmul.mubr.f32.gmra.mrb[0].mxu0 %v811
  %v993 = vpop.f32.mrb[0].mxu0
  %v994 = vadd.f32 %v771, %v993
  %v995 = vpop.f32.mrb[0].mxu0
  %v996 = vadd.f32 %v775, %v995
  %997 = vmatprep.mubr.f32.mxu0 0.0
  %998 = vmatmul.mubr.f32.gmra.mrb[0].mxu0 %v814
  %v999 = vpop.f32.mrb[0].mxu0
  %v1000 = vadd.f32 %v771, %v999
  %v1001 = vpop.f32.mrb[0].mxu0
  %v1002 = vadd.f32 %v775, %v1001
  %1003 = vmatprep.mubr.f32.mxu0 0.0
  %1004 = vmatmul.mubr.f32.gmra.mrb[0].mxu0 %v817
  %v1005 = vpop.f32.mrb[0].mxu0
  %v1006 = vadd.f32 %v771, %v1005
  %v1007 = vpop.f32.mrb[0].mxu0
  %v1008 = vadd.f32 %v775, %v1007
  %1009 = vmatprep.mubr.f32.mxu0 0.0
  %1010 = vmatmul.mubr.f32.gmra.mrb[0].mxu0 %v820
  %v1011 = vpop.f32.mrb[0].mxu0
  %v1012 = vadd.f32 %v771, %v1011
  %v1013 = vpop.f32.mrb[0].mxu0
  %v1014 = vadd.f32 %v775, %v1013
  %1015 = vmatprep.mubr.f32.mxu0 0.0
  %1016 = vmatmul.mubr.f32.gmra.mrb[0].mxu0 %v823
  %v1017 = vpop.f32.mrb[0].mxu0
  %v1018 = vadd.f32 %v771, %v1017
  %v1019 = vpop.f32.mrb[0].mxu0
  %v1020 = vadd.f32 %v775, %v1019
  %1021 = vmatprep.mubr.f32.mxu0 0.0
  %1022 = vmatmul.mubr.f32.gmra.mrb[0].mxu0 %v826
  %v1023 = vpop.f32.mrb[0].mxu0
  %v1024 = vadd.f32 %v771, %v1023
  %v1025 = vpop.f32.mrb[0].mxu0
  %v1026 = vadd.f32 %v775, %v1025
  %1027 = vmatprep.mubr.f32.mxu0 0.0
  %1028 = vmatmul.mubr.f32.gmra.mrb[0].mxu0 %v829
  %v1029 = vpop.f32.mrb[0].mxu0
  %v1030 = vadd.f32 %v771, %v1029
  %v1031 = vpop.f32.mrb[0].mxu0
  %v1032 = vadd.f32 %v775, %v1031
  %1033 = vmatprep.mubr.f32.mxu0 0.0
  %1034 = vmatmul.mubr.f32.gmra.mrb[0].mxu0 %v832
  %v1035 = vpop.f32.mrb[0].mxu0
  %v1036 = vadd.f32 %v771, %v1035
  %v1037 = vpop.f32.mrb[0].mxu0
  %v1038 = vadd.f32 %v775, %v1037
  %1039 = vmatprep.mubr.f32.mxu0 0.0
  %1040 = vmatmul.mubr.f32.gmra.mrb[0].mxu0 %v835
  %v1041 = vpop.f32.mrb[0].mxu0
  %v1042 = vadd.f32 %v771, %v1041
  %v1043 = vpop.f32.mrb[0].mxu0
  %v1044 = vadd.f32 %v775, %v1043
  %1045 = vmatprep.mubr.f32.mxu0 0.0
  %1046 = vmatmul.mubr.f32.gmra.mrb[0].mxu0 %v838
  %v1047 = vpop.f32.mrb[0].mxu0
  %v1048 = vadd.f32 %v771, %v1047
  %v1049 = vpop.f32.mrb[0].mxu0
  %v1050 = vadd.f32 %v775, %v1049
  %1051 = vmatprep.mubr.f32.mxu0 0.0
  %1052 = vmatmul.mubr.f32.gmra.mrb[0].mxu0 %v841
  %v1053 = vpop.f32.mrb[0].mxu0
  %v1054 = vadd.f32 %v771, %v1053
  %v1055 = vpop.f32.mrb[0].mxu0
  %v1056 = vadd.f32 %v775, %v1055
  %1057 = vmatprep.mubr.f32.mxu0 0.0
  %1058 = vmatmul.mubr.f32.gmra.mrb[0].mxu0 %v844
  %v1059 = vpop.f32.mrb[0].mxu0
  %v1060 = vadd.f32 %v771, %v1059
  %v1061 = vpop.f32.mrb[0].mxu0
  %v1062 = vadd.f32 %v775, %v1061
  %1063 = vmatprep.mubr.f32.mxu0 0.0
  %1064 = vmatmul.mubr.f32.gmra.mrb[0].mxu0 %v847
  %v1065 = vpop.f32.mrb[0].mxu0
  %v1066 = vadd.f32 %v771, %v1065
  %v1067 = vpop.f32.mrb[0].mxu0
  %v1068 = vadd.f32 %v775, %v1067
  %1069 = vmatprep.mubr.f32.mxu0 0.0
  %1070 = vmatmul.mubr.f32.gmra.mrb[0].mxu0 %v850
  %v1071 = vpop.f32.mrb[0].mxu0
  %v1072 = vadd.f32 %v771, %v1071
  %v1073 = vpop.f32.mrb[0].mxu0
  %v1074 = vadd.f32 %v775, %v1073
  %1075 = vmatprep.mubr.f32.mxu0 0.0
  %1076 = vmatmul.mubr.f32.gmra.mrb[0].mxu0 %v853
  %v1077 = vpop.f32.mrb[0].mxu0
  %v1078 = vadd.f32 %v771, %v1077
  %v1079 = vpop.f32.mrb[0].mxu0
  %v1080 = vadd.f32 %v775, %v1079
  %1081 = vmatprep.mubr.f32.mxu0 0.0
  %1082 = vmatmul.mubr.f32.gmra.mrb[0].mxu0 %v856
  %v1083 = vpop.f32.mrb[0].mxu0
  %v1084 = vadd.f32 %v771, %v1083
  %v1085 = vpop.f32.mrb[0].mxu0
  %v1086 = vadd.f32 %v775, %v1085
  %1087 = vmatprep.mubr.f32.mxu0 0.0
  %1088 = vmatmul.mubr.f32.gmra.mrb[0].mxu0 %v859
  %v1089 = vpop.f32.mrb[0].mxu0
  %v1090 = vadd.f32 %v771, %v1089
  %v1091 = vpop.f32.mrb[0].mxu0
  %v1092 = vadd.f32 %v775, %v1091
  %1093 = vmatprep.mubr.f32.mxu0 0.0
  %1094 = vmatmul.mubr.f32.gmra.mrb[0].mxu0 %v862
  %v1095 = vpop.f32.mrb[0].mxu0
  %v1096 = vadd.f32 %v771, %v1095
  %v1097 = vpop.f32.mrb[0].mxu0
  %v1098 = vadd.f32 %v775, %v1097
  %1099 = vmatprep.mubr.f32.mxu0 0.0
  %1100 = vmatmul.mubr.f32.gmra.mrb[0].mxu0 %v865
  %v1101 = vpop.f32.mrb[0].mxu0
  %v1102 = vadd.f32 %v771, %v1101
  %v1103 = vpop.f32.mrb[0].mxu0
  %v1104 = vadd.f32 %v775, %v1103
  %1105 = vmatprep.mubr.f32.mxu0 0.0
  %1106 = vmatmul.mubr.f32.gmra.mrb[0].mxu0 %v868
  %v1107 = vpop.f32.mrb[0].mxu0
  %v1108 = vadd.f32 %v771, %v1107
  %v1109 = vpop.f32.mrb[0].mxu0
  %v1110 = vadd.f32 %v775, %v1109
  %1111 = vmatprep.mubr.f32.mxu0 0.0
  %1112 = vmatmul.mubr.f32.gmra.mrb[0].mxu0 %v871
  %v1113 = vpop.f32.mrb[0].mxu0
  %v1114 = vadd.f32 %v771, %v1113
  %v1115 = vpop.f32.mrb[0].mxu0
  %v1116 = vadd.f32 %v775, %v1115
  %1117 = vmatprep.mubr.f32.mxu0 0.0
  %1118 = vmatmul.mubr.f32.gmra.mrb[0].mxu0 %v874
  %v1119 = vpop.f32.mrb[0].mxu0
  %v1120 = vadd.f32 %v771, %v1119
  %v1121 = vpop.f32.mrb[0].mxu0
  %v1122 = vadd.f32 %v775, %v1121
  %1123 = vmatprep.mubr.f32.mxu0 0.0
  %1124 = vmatmul.mubr.f32.gmra.mrb[0].mxu0 %v877
  %v1125 = vpop.f32.mrb[0].mxu0
  %v1126 = vadd.f32 %v771, %v1125
  %v1127 = vpop.f32.mrb[0].mxu0
  %v1128 = vadd.f32 %v775, %v1127
  %1129 = vmatprep.mubr.f32.mxu0 0.0
  %1130 = vmatmul.mubr.f32.gmra.mrb[0].mxu0 %v880
  %v1131 = vpop.f32.mrb[0].mxu0
  %v1132 = vadd.f32 %v771, %v1131
  %v1133 = vpop.f32.mrb[0].mxu0
  %v1134 = vadd.f32 %v775, %v1133
  %1135 = vmatprep.mubr.f32.mxu0 0.0
  %1136 = vmatmul.mubr.f32.gmra.mrb[0].mxu0 %v883
  %v1137 = vpop.f32.mrb[0].mxu0
  %v1138 = vadd.f32 %v771, %v1137
  %v1139 = vpop.f32.mrb[0].mxu0
  %v1140 = vadd.f32 %v775, %v1139
  %1141 = vdwg.mxu0
  %1142 = vmatprep.subr.mxu0 %v753
  %1143 = vmatpush1.msra.mxu0 %v752
  %1144 = vmatprep.subr.mxu0 %v757
  %1145 = vmatpush1.msra.mxu0 %v756
  %1146 = vmatprep.subr.mxu0 %v761
  %1147 = vmatpush1.msra.mxu0 %v760
  %1148 = vmatprep.subr.mxu0 %v765
  %1149 = vmatpush1.msra.mxu0 %v764
  %1150 = vmatprep.subr.mxu0 0.0
  %1151 = vmatpush1.msra.mxu0 0.0
  %1152 = vmatprep.subr.mxu0 0.0
  %1153 = vmatpush1.msra.mxu0 0.0
  %1154 = vmatprep.subr.mxu0 0.0
  %1155 = vmatpush1.msra.mxu0 0.0
  %1156 = vmatprep.subr.mxu0 0.0
  %1157 = vmatpush1.msra.mxu0 0.0
  %1158 = vmatprep.subr.mxu0 0.0
  %1159 = vmatpush1.msra.mxu0 0.0
  %1160 = vmatprep.subr.mxu0 0.0
  %1161 = vmatpush1.msra.mxu0 0.0
  %1162 = vmatprep.subr.mxu0 0.0
  %1163 = vmatpush1.msra.mxu0 0.0
  %1164 = vmatprep.subr.mxu0 0.0
  %1165 = vmatpush1.msra.mxu0 0.0
  %1166 = vmatprep.subr.mxu0 0.0
  %1167 = vmatpush1.msra.mxu0 0.0
  %1168 = vmatprep.subr.mxu0 0.0
  %1169 = vmatpush1.msra.mxu0 0.0
  %1170 = vmatprep.subr.mxu0 0.0
  %1171 = vmatpush1.msra.mxu0 0.0
  %1172 = vmatprep.subr.mxu0 0.0
  %1173 = vmatpush1.msra.mxu0 0.0
  %1174 = vmatprep.subr.mxu0 0.0
  %1175 = vmatpush1.msra.mxu0 0.0
  %1176 = vmatprep.subr.mxu0 0.0
  %1177 = vmatpush1.msra.mxu0 0.0
  %1178 = vmatprep.subr.mxu0 0.0
  %1179 = vmatpush1.msra.mxu0 0.0
  %1180 = vmatprep.subr.mxu0 0.0
  %1181 = vmatpush1.msra.mxu0 0.0
  %1182 = vmatprep.subr.mxu0 0.0
  %1183 = vmatpush1.msra.mxu0 0.0
  %1184 = vmatprep.subr.mxu0 0.0
  %1185 = vmatpush1.msra.mxu0 0.0
  %1186 = vmatprep.subr.mxu0 0.0
  %1187 = vmatpush1.msra.mxu0 0.0
  %1188 = vmatprep.subr.mxu0 0.0
  %1189 = vmatpush1.msra.mxu0 0.0
  %1190 = vmatprep.subr.mxu0 0.0
  %1191 = vmatpush1.msra.mxu0 0.0
  %1192 = vmatprep.subr.mxu0 0.0
  %1193 = vmatpush1.msra.mxu0 0.0
  %1194 = vmatprep.subr.mxu0 0.0
  %1195 = vmatpush1.msra.mxu0 0.0
  %1196 = vmatprep.subr.mxu0 0.0
  %1197 = vmatpush1.msra.mxu0 0.0
  %1198 = vmatprep.subr.mxu0 0.0
  %1199 = vmatpush1.msra.mxu0 0.0
  %1200 = vmatprep.subr.mxu0 0.0
  %1201 = vmatpush1.msra.mxu0 0.0
  %1202 = vmatprep.subr.mxu0 0.0
  %1203 = vmatpush1.msra.mxu0 0.0
  %1204 = vmatprep.subr.mxu0 0.0
  %1205 = vmatpush1.msra.mxu0 0.0
  %1206 = vmatprep.mubr.f32.mxu0 0.0
  %1207 = vmatmul.mubr.f32.gmra.mrb[0].mxu0 %v790
  %v1208 = vpop.f32.mrb[0].mxu0
  %v1209 = vadd.f32 %v779, %v1208
  %v1210 = vpop.f32.mrb[0].mxu0
  %v1211 = vadd.f32 %v783, %v1210
  %1212 = vmatprep.mubr.f32.mxu0 0.0
  %1213 = vmatmul.mubr.f32.gmra.mrb[0].mxu0 %v793
  %v1214 = vpop.f32.mrb[0].mxu0
  %v1215 = vadd.f32 %v779, %v1214
  %v1216 = vpop.f32.mrb[0].mxu0
  %v1217 = vadd.f32 %v783, %v1216
  %1218 = vmatprep.mubr.f32.mxu0 0.0
  %1219 = vmatmul.mubr.f32.gmra.mrb[0].mxu0 %v796
  %v1220 = vpop.f32.mrb[0].mxu0
  %v1221 = vadd.f32 %v779, %v1220
  %v1222 = vpop.f32.mrb[0].mxu0
  %v1223 = vadd.f32 %v783, %v1222
  %1224 = vmatprep.mubr.f32.mxu0 0.0
  %1225 = vmatmul.mubr.f32.gmra.mrb[0].mxu0 %v799
  %v1226 = vpop.f32.mrb[0].mxu0
  %v1227 = vadd.f32 %v779, %v1226
  %v1228 = vpop.f32.mrb[0].mxu0
  %v1229 = vadd.f32 %v783, %v1228
  %1230 = vmatprep.mubr.f32.mxu0 0.0
  %1231 = vmatmul.mubr.f32.gmra.mrb[0].mxu0 %v802
  %v1232 = vpop.f32.mrb[0].mxu0
  %v1233 = vadd.f32 %v779, %v1232
  %v1234 = vpop.f32.mrb[0].mxu0
  %v1235 = vadd.f32 %v783, %v1234
  %1236 = vmatprep.mubr.f32.mxu0 0.0
  %1237 = vmatmul.mubr.f32.gmra.mrb[0].mxu0 %v805
  %v1238 = vpop.f32.mrb[0].mxu0
  %v1239 = vadd.f32 %v779, %v1238
  %v1240 = vpop.f32.mrb[0].mxu0
  %v1241 = vadd.f32 %v783, %v1240
  %1242 = vmatprep.mubr.f32.mxu0 0.0
  %1243 = vmatmul.mubr.f32.gmra.mrb[0].mxu0 %v808
  %v1244 = vpop.f32.mrb[0].mxu0
  %v1245 = vadd.f32 %v779, %v1244
  %v1246 = vpop.f32.mrb[0].mxu0
  %v1247 = vadd.f32 %v783, %v1246
  %1248 = vmatprep.mubr.f32.mxu0 0.0
  %1249 = vmatmul.mubr.f32.gmra.mrb[0].mxu0 %v811
  %v1250 = vpop.f32.mrb[0].mxu0
  %v1251 = vadd.f32 %v779, %v1250
  %v1252 = vpop.f32.mrb[0].mxu0
  %v1253 = vadd.f32 %v783, %v1252
  %1254 = vmatprep.mubr.f32.mxu0 0.0
  %1255 = vmatmul.mubr.f32.gmra.mrb[0].mxu0 %v814
  %v1256 = vpop.f32.mrb[0].mxu0
  %v1257 = vadd.f32 %v779, %v1256
  %v1258 = vpop.f32.mrb[0].mxu0
  %v1259 = vadd.f32 %v783, %v1258
  %1260 = vmatprep.mubr.f32.mxu0 0.0
  %1261 = vmatmul.mubr.f32.gmra.mrb[0].mxu0 %v817
  %v1262 = vpop.f32.mrb[0].mxu0
  %v1263 = vadd.f32 %v779, %v1262
  %v1264 = vpop.f32.mrb[0].mxu0
  %v1265 = vadd.f32 %v783, %v1264
  %1266 = vmatprep.mubr.f32.mxu0 0.0
  %1267 = vmatmul.mubr.f32.gmra.mrb[0].mxu0 %v820
  %v1268 = vpop.f32.mrb[0].mxu0
  %v1269 = vadd.f32 %v779, %v1268
  %v1270 = vpop.f32.mrb[0].mxu0
  %v1271 = vadd.f32 %v783, %v1270
  %1272 = vmatprep.mubr.f32.mxu0 0.0
  %1273 = vmatmul.mubr.f32.gmra.mrb[0].mxu0 %v823
  %v1274 = vpop.f32.mrb[0].mxu0
  %v1275 = vadd.f32 %v779, %v1274
  %v1276 = vpop.f32.mrb[0].mxu0
  %v1277 = vadd.f32 %v783, %v1276
  %1278 = vmatprep.mubr.f32.mxu0 0.0
  %1279 = vmatmul.mubr.f32.gmra.mrb[0].mxu0 %v826
  %v1280 = vpop.f32.mrb[0].mxu0
  %v1281 = vadd.f32 %v779, %v1280
  %v1282 = vpop.f32.mrb[0].mxu0
  %v1283 = vadd.f32 %v783, %v1282
  %1284 = vmatprep.mubr.f32.mxu0 0.0
  %1285 = vmatmul.mubr.f32.gmra.mrb[0].mxu0 %v829
  %v1286 = vpop.f32.mrb[0].mxu0
  %v1287 = vadd.f32 %v779, %v1286
  %v1288 = vpop.f32.mrb[0].mxu0
  %v1289 = vadd.f32 %v783, %v1288
  %1290 = vmatprep.mubr.f32.mxu0 0.0
  %1291 = vmatmul.mubr.f32.gmra.mrb[0].mxu0 %v832
  %v1292 = vpop.f32.mrb[0].mxu0
  %v1293 = vadd.f32 %v779, %v1292
  %v1294 = vpop.f32.mrb[0].mxu0
  %v1295 = vadd.f32 %v783, %v1294
  %1296 = vmatprep.mubr.f32.mxu0 0.0
  %1297 = vmatmul.mubr.f32.gmra.mrb[0].mxu0 %v835
  %v1298 = vpop.f32.mrb[0].mxu0
  %v1299 = vadd.f32 %v779, %v1298
  %v1300 = vpop.f32.mrb[0].mxu0
  %v1301 = vadd.f32 %v783, %v1300
  %1302 = vmatprep.mubr.f32.mxu0 0.0
  %1303 = vmatmul.mubr.f32.gmra.mrb[0].mxu0 %v838
  %v1304 = vpop.f32.mrb[0].mxu0
  %v1305 = vadd.f32 %v779, %v1304
  %v1306 = vpop.f32.mrb[0].mxu0
  %v1307 = vadd.f32 %v783, %v1306
  %1308 = vmatprep.mubr.f32.mxu0 0.0
  %1309 = vmatmul.mubr.f32.gmra.mrb[0].mxu0 %v841
  %v1310 = vpop.f32.mrb[0].mxu0
  %v1311 = vadd.f32 %v779, %v1310
  %v1312 = vpop.f32.mrb[0].mxu0
  %v1313 = vadd.f32 %v783, %v1312
  %1314 = vmatprep.mubr.f32.mxu0 0.0
  %1315 = vmatmul.mubr.f32.gmra.mrb[0].mxu0 %v844
  %v1316 = vpop.f32.mrb[0].mxu0
  %v1317 = vadd.f32 %v779, %v1316
  %v1318 = vpop.f32.mrb[0].mxu0
  %v1319 = vadd.f32 %v783, %v1318
  %1320 = vmatprep.mubr.f32.mxu0 0.0
  %1321 = vmatmul.mubr.f32.gmra.mrb[0].mxu0 %v847
  %v1322 = vpop.f32.mrb[0].mxu0
  %v1323 = vadd.f32 %v779, %v1322
  %v1324 = vpop.f32.mrb[0].mxu0
  %v1325 = vadd.f32 %v783, %v1324
  %1326 = vmatprep.mubr.f32.mxu0 0.0
  %1327 = vmatmul.mubr.f32.gmra.mrb[0].mxu0 %v850
  %v1328 = vpop.f32.mrb[0].mxu0
  %v1329 = vadd.f32 %v779, %v1328
  %v1330 = vpop.f32.mrb[0].mxu0
  %v1331 = vadd.f32 %v783, %v1330
  %1332 = vmatprep.mubr.f32.mxu0 0.0
  %1333 = vmatmul.mubr.f32.gmra.mrb[0].mxu0 %v853
  %v1334 = vpop.f32.mrb[0].mxu0
  %v1335 = vadd.f32 %v779, %v1334
  %v1336 = vpop.f32.mrb[0].mxu0
  %v1337 = vadd.f32 %v783, %v1336
  %1338 = vmatprep.mubr.f32.mxu0 0.0
  %1339 = vmatmul.mubr.f32.gmra.mrb[0].mxu0 %v856
  %v1340 = vpop.f32.mrb[0].mxu0
  %v1341 = vadd.f32 %v779, %v1340
  %v1342 = vpop.f32.mrb[0].mxu0
  %v1343 = vadd.f32 %v783, %v1342
  %1344 = vmatprep.mubr.f32.mxu0 0.0
  %1345 = vmatmul.mubr.f32.gmra.mrb[0].mxu0 %v859
  %v1346 = vpop.f32.mrb[0].mxu0
  %v1347 = vadd.f32 %v779, %v1346
  %v1348 = vpop.f32.mrb[0].mxu0
  %v1349 = vadd.f32 %v783, %v1348
  %1350 = vmatprep.mubr.f32.mxu0 0.0
  %1351 = vmatmul.mubr.f32.gmra.mrb[0].mxu0 %v862
  %v1352 = vpop.f32.mrb[0].mxu0
  %v1353 = vadd.f32 %v779, %v1352
  %v1354 = vpop.f32.mrb[0].mxu0
  %v1355 = vadd.f32 %v783, %v1354
  %1356 = vmatprep.mubr.f32.mxu0 0.0
  %1357 = vmatmul.mubr.f32.gmra.mrb[0].mxu0 %v865
  %v1358 = vpop.f32.mrb[0].mxu0
  %v1359 = vadd.f32 %v779, %v1358
  %v1360 = vpop.f32.mrb[0].mxu0
  %v1361 = vadd.f32 %v783, %v1360
  %1362 = vmatprep.mubr.f32.mxu0 0.0
  %1363 = vmatmul.mubr.f32.gmra.mrb[0].mxu0 %v868
  %v1364 = vpop.f32.mrb[0].mxu0
  %v1365 = vadd.f32 %v779, %v1364
  %v1366 = vpop.f32.mrb[0].mxu0
  %v1367 = vadd.f32 %v783, %v1366
  %1368 = vmatprep.mubr.f32.mxu0 0.0
  %1369 = vmatmul.mubr.f32.gmra.mrb[0].mxu0 %v871
  %v1370 = vpop.f32.mrb[0].mxu0
  %v1371 = vadd.f32 %v779, %v1370
  %v1372 = vpop.f32.mrb[0].mxu0
  %v1373 = vadd.f32 %v783, %v1372
  %1374 = vmatprep.mubr.f32.mxu0 0.0
  %1375 = vmatmul.mubr.f32.gmra.mrb[0].mxu0 %v874
  %v1376 = vpop.f32.mrb[0].mxu0
  %v1377 = vadd.f32 %v779, %v1376
  %v1378 = vpop.f32.mrb[0].mxu0
  %v1379 = vadd.f32 %v783, %v1378
  %1380 = vmatprep.mubr.f32.mxu0 0.0
  %1381 = vmatmul.mubr.f32.gmra.mrb[0].mxu0 %v877
  %v1382 = vpop.f32.mrb[0].mxu0
  %v1383 = vadd.f32 %v779, %v1382
  %v1384 = vpop.f32.mrb[0].mxu0
  %v1385 = vadd.f32 %v783, %v1384
  %1386 = vmatprep.mubr.f32.mxu0 0.0
  %1387 = vmatmul.mubr.f32.gmra.mrb[0].mxu0 %v880
  %v1388 = vpop.f32.mrb[0].mxu0
  %v1389 = vadd.f32 %v779, %v1388
  %v1390 = vpop.f32.mrb[0].mxu0
  %v1391 = vadd.f32 %v783, %v1390
  %1392 = vmatprep.mubr.f32.mxu0 0.0
  %1393 = vmatmul.mubr.f32.gmra.mrb[0].mxu0 %v883
  %v1394 = vpop.f32.mrb[0].mxu0
  %v1395 = vadd.f32 %v779, %v1394
  %v1396 = vpop.f32.mrb[0].mxu0
  %v1397 = vadd.f32 %v783, %v1396
  %1398 = vdwg.mxu0
  %v1399 = vmax.f32 %v952, 0.0
  %v1400 = vmax.f32 %v954, 0.0
  %v1401 = vmax.f32 %v1209, 0.0
  %v1402 = vmax.f32 %v1211, 0.0
  %v1403 = vmax.f32 %v958, 0.0
  %v1404 = vmax.f32 %v960, 0.0
  %v1405 = vmax.f32 %v1215, 0.0
  %v1406 = vmax.f32 %v1217, 0.0
  %v1407 = vmax.f32 %v964, 0.0
  %v1408 = vmax.f32 %v966, 0.0
  %v1409 = vmax.f32 %v1221, 0.0
  %v1410 = vmax.f32 %v1223, 0.0
  %v1411 = vmax.f32 %v970, 0.0
  %v1412 = vmax.f32 %v972, 0.0
  %v1413 = vmax.f32 %v1227, 0.0
  %v1414 = vmax.f32 %v1229, 0.0
  %v1415 = vmax.f32 %v976, 0.0
  %v1416 = vmax.f32 %v978, 0.0
  %v1417 = vmax.f32 %v1233, 0.0
  %v1418 = vmax.f32 %v1235, 0.0
  %v1419 = vmax.f32 %v982, 0.0
  %v1420 = vmax.f32 %v984, 0.0
  %v1421 = vmax.f32 %v1239, 0.0
  %v1422 = vmax.f32 %v1241, 0.0
  %v1423 = vmax.f32 %v988, 0.0
  %v1424 = vmax.f32 %v990, 0.0
  %v1425 = vmax.f32 %v1245, 0.0
  %v1426 = vmax.f32 %v1247, 0.0
  %v1427 = vmax.f32 %v994, 0.0
  %v1428 = vmax.f32 %v996, 0.0
  %v1429 = vmax.f32 %v1251, 0.0
  %v1430 = vmax.f32 %v1253, 0.0
  %v1431 = vmax.f32 %v1000, 0.0
  %v1432 = vmax.f32 %v1002, 0.0
  %v1433 = vmax.f32 %v1257, 0.0
  %v1434 = vmax.f32 %v1259, 0.0
  %v1435 = vmax.f32 %v1006, 0.0
  %v1436 = vmax.f32 %v1008, 0.0
  %v1437 = vmax.f32 %v1263, 0.0
  %v1438 = vmax.f32 %v1265, 0.0
  %v1439 = vmax.f32 %v1012, 0.0
  %v1440 = vmax.f32 %v1014, 0.0
  %v1441 = vmax.f32 %v1269, 0.0
  %v1442 = vmax.f32 %v1271, 0.0
  %v1443 = vmax.f32 %v1018, 0.0
  %v1444 = vmax.f32 %v1020, 0.0
  %v1445 = vmax.f32 %v1275, 0.0
  %v1446 = vmax.f32 %v1277, 0.0
  %v1447 = vmax.f32 %v1024, 0.0
  %v1448 = vmax.f32 %v1026, 0.0
  %v1449 = vmax.f32 %v1281, 0.0
  %v1450 = vmax.f32 %v1283, 0.0
  %v1451 = vmax.f32 %v1030, 0.0
  %v1452 = vmax.f32 %v1032, 0.0
  %v1453 = vmax.f32 %v1287, 0.0
  %v1454 = vmax.f32 %v1289, 0.0
  %v1455 = vmax.f32 %v1036, 0.0
  %v1456 = vmax.f32 %v1038, 0.0
  %v1457 = vmax.f32 %v1293, 0.0
  %v1458 = vmax.f32 %v1295, 0.0
  %v1459 = vmax.f32 %v1042, 0.0
  %v1460 = vmax.f32 %v1044, 0.0
  %v1461 = vmax.f32 %v1299, 0.0
  %v1462 = vmax.f32 %v1301, 0.0
  %v1463 = vmax.f32 %v1048, 0.0
  %v1464 = vmax.f32 %v1050, 0.0
  %v1465 = vmax.f32 %v1305, 0.0
  %v1466 = vmax.f32 %v1307, 0.0
  %v1467 = vmax.f32 %v1054, 0.0
  %v1468 = vmax.f32 %v1056, 0.0
  %v1469 = vmax.f32 %v1311, 0.0
  %v1470 = vmax.f32 %v1313, 0.0
  %v1471 = vmax.f32 %v1060, 0.0
  %v1472 = vmax.f32 %v1062, 0.0
  %v1473 = vmax.f32 %v1317, 0.0
  %v1474 = vmax.f32 %v1319, 0.0
  %v1475 = vmax.f32 %v1066, 0.0
  %v1476 = vmax.f32 %v1068, 0.0
  %v1477 = vmax.f32 %v1323, 0.0
  %v1478 = vmax.f32 %v1325, 0.0
  %v1479 = vmax.f32 %v1072, 0.0
  %v1480 = vmax.f32 %v1074, 0.0
  %v1481 = vmax.f32 %v1329, 0.0
  %v1482 = vmax.f32 %v1331, 0.0
  %v1483 = vmax.f32 %v1078, 0.0
  %v1484 = vmax.f32 %v1080, 0.0
  %v1485 = vmax.f32 %v1335, 0.0
  %v1486 = vmax.f32 %v1337, 0.0
  %v1487 = vmax.f32 %v1084, 0.0
  %v1488 = vmax.f32 %v1086, 0.0
  %v1489 = vmax.f32 %v1341, 0.0
  %v1490 = vmax.f32 %v1343, 0.0
  %v1491 = vmax.f32 %v1090, 0.0
  %v1492 = vmax.f32 %v1092, 0.0
  %v1493 = vmax.f32 %v1347, 0.0
  %v1494 = vmax.f32 %v1349, 0.0
  %v1495 = vmax.f32 %v1096, 0.0
  %v1496 = vmax.f32 %v1098, 0.0
  %v1497 = vmax.f32 %v1353, 0.0
  %v1498 = vmax.f32 %v1355, 0.0
  %v1499 = vmax.f32 %v1102, 0.0
  %v1500 = vmax.f32 %v1104, 0.0
  %v1501 = vmax.f32 %v1359, 0.0
  %v1502 = vmax.f32 %v1361, 0.0
  %v1503 = vmax.f32 %v1108, 0.0
  %v1504 = vmax.f32 %v1110, 0.0
  %v1505 = vmax.f32 %v1365, 0.0
  %v1506 = vmax.f32 %v1367, 0.0
  %v1507 = vmax.f32 %v1114, 0.0
  %v1508 = vmax.f32 %v1116, 0.0
  %v1509 = vmax.f32 %v1371, 0.0
  %v1510 = vmax.f32 %v1373, 0.0
  %v1511 = vmax.f32 %v1120, 0.0
  %v1512 = vmax.f32 %v1122, 0.0
  %v1513 = vmax.f32 %v1377, 0.0
  %v1514 = vmax.f32 %v1379, 0.0
  %v1515 = vmax.f32 %v1126, 0.0
  %v1516 = vmax.f32 %v1128, 0.0
  %v1517 = vmax.f32 %v1383, 0.0
  %v1518 = vmax.f32 %v1385, 0.0
  %v1519 = vmax.f32 %v1132, 0.0
  %v1520 = vmax.f32 %v1134, 0.0
  %v1521 = vmax.f32 %v1389, 0.0
  %v1522 = vmax.f32 %v1391, 0.0
  %v1523 = vmax.f32 %v1138, 0.0
  %v1524 = vmax.f32 %v1140, 0.0
  %v1525 = vmax.f32 %v1395, 0.0
  %v1526 = vmax.f32 %v1397, 0.0
  %v1527 = vld [vmem:[#allocation3] sm:$0xff]
  %v1528 = vld [vmem:[#allocation3 + $0x8] sm:$0xff]
  %v1529 = vld [vmem:[#allocation3 + $0x10] sm:$0xff]
  %v1530 = vld [vmem:[#allocation3 + $0x18] sm:$0xff]
  %v1531 = vld [vmem:[#allocation3 + $0x20] sm:$0xff]
  %v1532 = vld [vmem:[#allocation3 + $0x28] sm:$0xff]
  %v1533 = vld [vmem:[#allocation3 + $0x30] sm:$0xff]
  %v1534 = vld [vmem:[#allocation3 + $0x38] sm:$0xff]
  %v1535 = vld [vmem:[#allocation3 + $0x40] sm:$0xff]
  %v1536 = vld [vmem:[#allocation3 + $0x48] sm:$0xff]
  %v1537 = vld [vmem:[#allocation3 + $0x50] sm:$0xff]
  %v1538 = vld [vmem:[#allocation3 + $0x58] sm:$0xff]
  %v1539 = vld [vmem:[#allocation3 + $0x60] sm:$0xff]
  %v1540 = vld [vmem:[#allocation3 + $0x68] sm:$0xff]
  %v1541 = vld [vmem:[#allocation3 + $0x70] sm:$0xff]
  %v1542 = vld [vmem:[#allocation3 + $0x78] sm:$0xff]
  %v1543 = vld [vmem:[#allocation3 + $0x80] sm:$0xff]
  %v1544 = vld [vmem:[#allocation3 + $0x88] sm:$0xff]
  %v1545 = vld [vmem:[#allocation3 + $0x90] sm:$0xff]
  %v1546 = vld [vmem:[#allocation3 + $0x98] sm:$0xff]
  %v1547 = vld [vmem:[#allocation3 + $0xa0] sm:$0xff]
  %v1548 = vld [vmem:[#allocation3 + $0xa8] sm:$0xff]
  %v1549 = vld [vmem:[#allocation3 + $0xb0] sm:$0xff]
  %v1550 = vld [vmem:[#allocation3 + $0xb8] sm:$0xff]
  %v1551 = vld [vmem:[#allocation3 + $0xc0] sm:$0xff]
  %v1552 = vld [vmem:[#allocation3 + $0xc8] sm:$0xff]
  %v1553 = vld [vmem:[#allocation3 + $0xd0] sm:$0xff]
  %v1554 = vld [vmem:[#allocation3 + $0xd8] sm:$0xff]
  %v1555 = vld [vmem:[#allocation3 + $0xe0] sm:$0xff]
  %v1556 = vld [vmem:[#allocation3 + $0xe8] sm:$0xff]
  %v1557 = vld [vmem:[#allocation3 + $0xf0] sm:$0xff]
  %v1558 = vld [vmem:[#allocation3 + $0xf8] sm:$0xff]
  %v1559 = vld [vmem:[%s5] sm:$0xff]
  %v1560 = vld [vmem:[%s5 + $0x8] sm:$0xff]
  %v1561 = vld [vmem:[%s5 + $0x10] sm:$0xff]
  %v1562 = vld [vmem:[%s5 + $0x18] sm:$0xff]
  %v1563 = vld [vmem:[%s5 + $0x20] sm:$0xff]
  %v1564 = vld [vmem:[%s5 + $0x28] sm:$0xff]
  %v1565 = vld [vmem:[%s5 + $0x30] sm:$0xff]
  %v1566 = vld [vmem:[%s5 + $0x38] sm:$0xff]
  %v1567 = vld [vmem:[%s5 + $0x40] sm:$0xff]
  %v1568 = vld [vmem:[%s5 + $0x48] sm:$0xff]
  %v1569 = vld [vmem:[%s5 + $0x50] sm:$0xff]
  %v1570 = vld [vmem:[%s5 + $0x58] sm:$0xff]
  %v1571 = vld [vmem:[%s5 + $0x60] sm:$0xff]
  %v1572 = vld [vmem:[%s5 + $0x68] sm:$0xff]
  %v1573 = vld [vmem:[%s5 + $0x70] sm:$0xff]
  %v1574 = vld [vmem:[%s5 + $0x78] sm:$0xff]
  %v1575 = vld [vmem:[%s5 + $0x80] sm:$0xff]
  %v1576 = vld [vmem:[%s5 + $0x88] sm:$0xff]
  %v1577 = vld [vmem:[%s5 + $0x90] sm:$0xff]
  %v1578 = vld [vmem:[%s5 + $0x98] sm:$0xff]
  %v1579 = vld [vmem:[%s5 + $0xa0] sm:$0xff]
  %v1580 = vld [vmem:[%s5 + $0xa8] sm:$0xff]
  %v1581 = vld [vmem:[%s5 + $0xb0] sm:$0xff]
  %v1582 = vld [vmem:[%s5 + $0xb8] sm:$0xff]
  %v1583 = vld [vmem:[%s5 + $0xc0] sm:$0xff]
  %v1584 = vld [vmem:[%s5 + $0xc8] sm:$0xff]
  %v1585 = vld [vmem:[%s5 + $0xd0] sm:$0xff]
  %v1586 = vld [vmem:[%s5 + $0xd8] sm:$0xff]
  %v1587 = vld [vmem:[%s5 + $0xe0] sm:$0xff]
  %v1588 = vld [vmem:[%s5 + $0xe8] sm:$0xff]
  %v1589 = vld [vmem:[%s5 + $0xf0] sm:$0xff]
  %v1590 = vld [vmem:[%s5 + $0xf8] sm:$0xff]
  %v1591 = vld [vmem:[%s5 + $0x100] sm:$0xff]
  %v1592 = vld [vmem:[%s5 + $0x108] sm:$0xff]
  %v1593 = vld [vmem:[%s5 + $0x110] sm:$0xff]
  %v1594 = vld [vmem:[%s5 + $0x118] sm:$0xff]
  %v1595 = vld [vmem:[%s5 + $0x120] sm:$0xff]
  %v1596 = vld [vmem:[%s5 + $0x128] sm:$0xff]
  %v1597 = vld [vmem:[%s5 + $0x130] sm:$0xff]
  %v1598 = vld [vmem:[%s5 + $0x138] sm:$0xff]
  %v1599 = vld [vmem:[%s5 + $0x140] sm:$0xff]
  %v1600 = vld [vmem:[%s5 + $0x148] sm:$0xff]
  %v1601 = vld [vmem:[%s5 + $0x150] sm:$0xff]
  %v1602 = vld [vmem:[%s5 + $0x158] sm:$0xff]
  %v1603 = vld [vmem:[%s5 + $0x160] sm:$0xff]
  %v1604 = vld [vmem:[%s5 + $0x168] sm:$0xff]
  %v1605 = vld [vmem:[%s5 + $0x170] sm:$0xff]
  %v1606 = vld [vmem:[%s5 + $0x178] sm:$0xff]
  %v1607 = vld [vmem:[%s5 + $0x180] sm:$0xff]
  %v1608 = vld [vmem:[%s5 + $0x188] sm:$0xff]
  %v1609 = vld [vmem:[%s5 + $0x190] sm:$0xff]
  %v1610 = vld [vmem:[%s5 + $0x198] sm:$0xff]
  %v1611 = vld [vmem:[%s5 + $0x1a0] sm:$0xff]
  %v1612 = vld [vmem:[%s5 + $0x1a8] sm:$0xff]
  %v1613 = vld [vmem:[%s5 + $0x1b0] sm:$0xff]
  %v1614 = vld [vmem:[%s5 + $0x1b8] sm:$0xff]
  %v1615 = vld [vmem:[%s5 + $0x1c0] sm:$0xff]
  %v1616 = vld [vmem:[%s5 + $0x1c8] sm:$0xff]
  %v1617 = vld [vmem:[%s5 + $0x1d0] sm:$0xff]
  %v1618 = vld [vmem:[%s5 + $0x1d8] sm:$0xff]
  %v1619 = vld [vmem:[%s5 + $0x1e0] sm:$0xff]
  %v1620 = vld [vmem:[%s5 + $0x1e8] sm:$0xff]
  %v1621 = vld [vmem:[%s5 + $0x1f0] sm:$0xff]
  %v1622 = vld [vmem:[%s5 + $0x1f8] sm:$0xff]
  %1623 = vmatprep.subr.mxu0 0.0
  %1624 = vmatpush1.msra.mxu0 %v1559
  %1625 = vmatprep.subr.mxu0 0.0
  %1626 = vmatpush1.msra.mxu0 %v1560
  %1627 = vmatprep.subr.mxu0 0.0
  %1628 = vmatpush1.msra.mxu0 %v1561
  %1629 = vmatprep.subr.mxu0 0.0
  %1630 = vmatpush1.msra.mxu0 %v1562
  %1631 = vmatprep.subr.mxu0 0.0
  %1632 = vmatpush1.msra.mxu0 %v1563
  %1633 = vmatprep.subr.mxu0 0.0
  %1634 = vmatpush1.msra.mxu0 %v1564
  %1635 = vmatprep.subr.mxu0 0.0
  %1636 = vmatpush1.msra.mxu0 %v1565
  %1637 = vmatprep.subr.mxu0 0.0
  %1638 = vmatpush1.msra.mxu0 %v1566
  %1639 = vmatprep.subr.mxu0 0.0
  %1640 = vmatpush1.msra.mxu0 %v1567
  %1641 = vmatprep.subr.mxu0 0.0
  %1642 = vmatpush1.msra.mxu0 %v1568
  %1643 = vmatprep.subr.mxu0 0.0
  %1644 = vmatpush1.msra.mxu0 %v1569
  %1645 = vmatprep.subr.mxu0 0.0
  %1646 = vmatpush1.msra.mxu0 %v1570
  %1647 = vmatprep.subr.mxu0 0.0
  %1648 = vmatpush1.msra.mxu0 %v1571
  %1649 = vmatprep.subr.mxu0 0.0
  %1650 = vmatpush1.msra.mxu0 %v1572
  %1651 = vmatprep.subr.mxu0 0.0
  %1652 = vmatpush1.msra.mxu0 %v1573
  %1653 = vmatprep.subr.mxu0 0.0
  %1654 = vmatpush1.msra.mxu0 %v1574
  %1655 = vmatprep.subr.mxu0 0.0
  %1656 = vmatpush1.msra.mxu0 %v1575
  %1657 = vmatprep.subr.mxu0 0.0
  %1658 = vmatpush1.msra.mxu0 %v1576
  %1659 = vmatprep.subr.mxu0 0.0
  %1660 = vmatpush1.msra.mxu0 %v1577
  %1661 = vmatprep.subr.mxu0 0.0
  %1662 = vmatpush1.msra.mxu0 %v1578
  %1663 = vmatprep.subr.mxu0 0.0
  %1664 = vmatpush1.msra.mxu0 %v1579
  %1665 = vmatprep.subr.mxu0 0.0
  %1666 = vmatpush1.msra.mxu0 %v1580
  %1667 = vmatprep.subr.mxu0 0.0
  %1668 = vmatpush1.msra.mxu0 %v1581
  %1669 = vmatprep.subr.mxu0 0.0
  %1670 = vmatpush1.msra.mxu0 %v1582
  %1671 = vmatprep.subr.mxu0 0.0
  %1672 = vmatpush1.msra.mxu0 %v1583
  %1673 = vmatprep.subr.mxu0 0.0
  %1674 = vmatpush1.msra.mxu0 %v1584
  %1675 = vmatprep.subr.mxu0 0.0
  %1676 = vmatpush1.msra.mxu0 %v1585
  %1677 = vmatprep.subr.mxu0 0.0
  %1678 = vmatpush1.msra.mxu0 %v1586
  %1679 = vmatprep.subr.mxu0 0.0
  %1680 = vmatpush1.msra.mxu0 %v1587
  %1681 = vmatprep.subr.mxu0 0.0
  %1682 = vmatpush1.msra.mxu0 %v1588
  %1683 = vmatprep.subr.mxu0 0.0
  %1684 = vmatpush1.msra.mxu0 %v1589
  %1685 = vmatprep.subr.mxu0 0.0
  %1686 = vmatpush1.msra.mxu0 %v1590
  %1687 = vmatprep.mubr.f32.mxu0 %v1400
  %1688 = vmatmul.mubr.f32.gmra.mrb[0].mxu0 %v1399
  %v1689 = vpop.f32.mrb[0].mxu0
  %v1690 = vadd.f32 0.0, %v1689
  %v1691 = vpop.f32.mrb[0].mxu0
  %1692 = vmatprep.mubr.f32.mxu0 %v1404
  %1693 = vmatmul.mubr.f32.gmra.mrb[0].mxu0 %v1403
  %v1694 = vpop.f32.mrb[0].mxu0
  %v1695 = vadd.f32 0.0, %v1694
  %v1696 = vpop.f32.mrb[0].mxu0
  %1697 = vmatprep.mubr.f32.mxu0 %v1408
  %1698 = vmatmul.mubr.f32.gmra.mrb[0].mxu0 %v1407
  %v1699 = vpop.f32.mrb[0].mxu0
  %v1700 = vadd.f32 0.0, %v1699
  %v1701 = vpop.f32.mrb[0].mxu0
  %1702 = vmatprep.mubr.f32.mxu0 %v1412
  %1703 = vmatmul.mubr.f32.gmra.mrb[0].mxu0 %v1411
  %v1704 = vpop.f32.mrb[0].mxu0
  %v1705 = vadd.f32 0.0, %v1704
  %v1706 = vpop.f32.mrb[0].mxu0
  %1707 = vmatprep.mubr.f32.mxu0 %v1416
  %1708 = vmatmul.mubr.f32.gmra.mrb[0].mxu0 %v1415
  %v1709 = vpop.f32.mrb[0].mxu0
  %v1710 = vadd.f32 0.0, %v1709
  %v1711 = vpop.f32.mrb[0].mxu0
  %1712 = vmatprep.mubr.f32.mxu0 %v1420
  %1713 = vmatmul.mubr.f32.gmra.mrb[0].mxu0 %v1419
  %v1714 = vpop.f32.mrb[0].mxu0
  %v1715 = vadd.f32 0.0, %v1714
  %v1716 = vpop.f32.mrb[0].mxu0
  %1717 = vmatprep.mubr.f32.mxu0 %v1424
  %1718 = vmatmul.mubr.f32.gmra.mrb[0].mxu0 %v1423
  %v1719 = vpop.f32.mrb[0].mxu0
  %v1720 = vadd.f32 0.0, %v1719
  %v1721 = vpop.f32.mrb[0].mxu0
  %1722 = vmatprep.mubr.f32.mxu0 %v1428
  %1723 = vmatmul.mubr.f32.gmra.mrb[0].mxu0 %v1427
  %v1724 = vpop.f32.mrb[0].mxu0
  %v1725 = vadd.f32 0.0, %v1724
  %v1726 = vpop.f32.mrb[0].mxu0
  %1727 = vmatprep.mubr.f32.mxu0 %v1432
  %1728 = vmatmul.mubr.f32.gmra.mrb[0].mxu0 %v1431
  %v1729 = vpop.f32.mrb[0].mxu0
  %v1730 = vadd.f32 0.0, %v1729
  %v1731 = vpop.f32.mrb[0].mxu0
  %1732 = vmatprep.mubr.f32.mxu0 %v1436
  %1733 = vmatmul.mubr.f32.gmra.mrb[0].mxu0 %v1435
  %v1734 = vpop.f32.mrb[0].mxu0
  %v1735 = vadd.f32 0.0, %v1734
  %v1736 = vpop.f32.mrb[0].mxu0
  %1737 = vmatprep.mubr.f32.mxu0 %v1440
  %1738 = vmatmul.mubr.f32.gmra.mrb[0].mxu0 %v1439
  %v1739 = vpop.f32.mrb[0].mxu0
  %v1740 = vadd.f32 0.0, %v1739
  %v1741 = vpop.f32.mrb[0].mxu0
  %1742 = vmatprep.mubr.f32.mxu0 %v1444
  %1743 = vmatmul.mubr.f32.gmra.mrb[0].mxu0 %v1443
  %v1744 = vpop.f32.mrb[0].mxu0
  %v1745 = vadd.f32 0.0, %v1744
  %v1746 = vpop.f32.mrb[0].mxu0
  %1747 = vmatprep.mubr.f32.mxu0 %v1448
  %1748 = vmatmul.mubr.f32.gmra.mrb[0].mxu0 %v1447
  %v1749 = vpop.f32.mrb[0].mxu0
  %v1750 = vadd.f32 0.0, %v1749
  %v1751 = vpop.f32.mrb[0].mxu0
  %1752 = vmatprep.mubr.f32.mxu0 %v1452
  %1753 = vmatmul.mubr.f32.gmra.mrb[0].mxu0 %v1451
  %v1754 = vpop.f32.mrb[0].mxu0
  %v1755 = vadd.f32 0.0, %v1754
  %v1756 = vpop.f32.mrb[0].mxu0
  %1757 = vmatprep.mubr.f32.mxu0 %v1456
  %1758 = vmatmul.mubr.f32.gmra.mrb[0].mxu0 %v1455
  %v1759 = vpop.f32.mrb[0].mxu0
  %v1760 = vadd.f32 0.0, %v1759
  %v1761 = vpop.f32.mrb[0].mxu0
  %1762 = vmatprep.mubr.f32.mxu0 %v1460
  %1763 = vmatmul.mubr.f32.gmra.mrb[0].mxu0 %v1459
  %v1764 = vpop.f32.mrb[0].mxu0
  %v1765 = vadd.f32 0.0, %v1764
  %v1766 = vpop.f32.mrb[0].mxu0
  %1767 = vmatprep.mubr.f32.mxu0 %v1464
  %1768 = vmatmul.mubr.f32.gmra.mrb[0].mxu0 %v1463
  %v1769 = vpop.f32.mrb[0].mxu0
  %v1770 = vadd.f32 0.0, %v1769
  %v1771 = vpop.f32.mrb[0].mxu0
  %1772 = vmatprep.mubr.f32.mxu0 %v1468
  %1773 = vmatmul.mubr.f32.gmra.mrb[0].mxu0 %v1467
  %v1774 = vpop.f32.mrb[0].mxu0
  %v1775 = vadd.f32 0.0, %v1774
  %v1776 = vpop.f32.mrb[0].mxu0
  %1777 = vmatprep.mubr.f32.mxu0 %v1472
  %1778 = vmatmul.mubr.f32.gmra.mrb[0].mxu0 %v1471
  %v1779 = vpop.f32.mrb[0].mxu0
  %v1780 = vadd.f32 0.0, %v1779
  %v1781 = vpop.f32.mrb[0].mxu0
  %1782 = vmatprep.mubr.f32.mxu0 %v1476
  %1783 = vmatmul.mubr.f32.gmra.mrb[0].mxu0 %v1475
  %v1784 = vpop.f32.mrb[0].mxu0
  %v1785 = vadd.f32 0.0, %v1784
  %v1786 = vpop.f32.mrb[0].mxu0
  %1787 = vmatprep.mubr.f32.mxu0 %v1480
  %1788 = vmatmul.mubr.f32.gmra.mrb[0].mxu0 %v1479
  %v1789 = vpop.f32.mrb[0].mxu0
  %v1790 = vadd.f32 0.0, %v1789
  %v1791 = vpop.f32.mrb[0].mxu0
  %1792 = vmatprep.mubr.f32.mxu0 %v1484
  %1793 = vmatmul.mubr.f32.gmra.mrb[0].mxu0 %v1483
  %v1794 = vpop.f32.mrb[0].mxu0
  %v1795 = vadd.f32 0.0, %v1794
  %v1796 = vpop.f32.mrb[0].mxu0
  %1797 = vmatprep.mubr.f32.mxu0 %v1488
  %1798 = vmatmul.mubr.f32.gmra.mrb[0].mxu0 %v1487
  %v1799 = vpop.f32.mrb[0].mxu0
  %v1800 = vadd.f32 0.0, %v1799
  %v1801 = vpop.f32.mrb[0].mxu0
  %1802 = vmatprep.mubr.f32.mxu0 %v1492
  %1803 = vmatmul.mubr.f32.gmra.mrb[0].mxu0 %v1491
  %v1804 = vpop.f32.mrb[0].mxu0
  %v1805 = vadd.f32 0.0, %v1804
  %v1806 = vpop.f32.mrb[0].mxu0
  %1807 = vmatprep.mubr.f32.mxu0 %v1496
  %1808 = vmatmul.mubr.f32.gmra.mrb[0].mxu0 %v1495
  %v1809 = vpop.f32.mrb[0].mxu0
  %v1810 = vadd.f32 0.0, %v1809
  %v1811 = vpop.f32.mrb[0].mxu0
  %1812 = vmatprep.mubr.f32.mxu0 %v1500
  %1813 = vmatmul.mubr.f32.gmra.mrb[0].mxu0 %v1499
  %v1814 = vpop.f32.mrb[0].mxu0
  %v1815 = vadd.f32 0.0, %v1814
  %v1816 = vpop.f32.mrb[0].mxu0
  %1817 = vmatprep.mubr.f32.mxu0 %v1504
  %1818 = vmatmul.mubr.f32.gmra.mrb[0].mxu0 %v1503
  %v1819 = vpop.f32.mrb[0].mxu0
  %v1820 = vadd.f32 0.0, %v1819
  %v1821 = vpop.f32.mrb[0].mxu0
  %1822 = vmatprep.mubr.f32.mxu0 %v1508
  %1823 = vmatmul.mubr.f32.gmra.mrb[0].mxu0 %v1507
  %v1824 = vpop.f32.mrb[0].mxu0
  %v1825 = vadd.f32 0.0, %v1824
  %v1826 = vpop.f32.mrb[0].mxu0
  %1827 = vmatprep.mubr.f32.mxu0 %v1512
  %1828 = vmatmul.mubr.f32.gmra.mrb[0].mxu0 %v1511
  %v1829 = vpop.f32.mrb[0].mxu0
  %v1830 = vadd.f32 0.0, %v1829
  %v1831 = vpop.f32.mrb[0].mxu0
  %1832 = vmatprep.mubr.f32.mxu0 %v1516
  %1833 = vmatmul.mubr.f32.gmra.mrb[0].mxu0 %v1515
  %v1834 = vpop.f32.mrb[0].mxu0
  %v1835 = vadd.f32 0.0, %v1834
  %v1836 = vpop.f32.mrb[0].mxu0
  %1837 = vmatprep.mubr.f32.mxu0 %v1520
  %1838 = vmatmul.mubr.f32.gmra.mrb[0].mxu0 %v1519
  %v1839 = vpop.f32.mrb[0].mxu0
  %v1840 = vadd.f32 0.0, %v1839
  %v1841 = vpop.f32.mrb[0].mxu0
  %1842 = vmatprep.mubr.f32.mxu0 %v1524
  %1843 = vmatmul.mubr.f32.gmra.mrb[0].mxu0 %v1523
  %v1844 = vpop.f32.mrb[0].mxu0
  %v1845 = vadd.f32 0.0, %v1844
  %v1846 = vpop.f32.mrb[0].mxu0
  %1847 = vdwg.mxu0
  %1848 = vmatprep.subr.mxu0 0.0
  %1849 = vmatpush1.msra.mxu0 %v1591
  %1850 = vmatprep.subr.mxu0 0.0
  %1851 = vmatpush1.msra.mxu0 %v1592
  %1852 = vmatprep.subr.mxu0 0.0
  %1853 = vmatpush1.msra.mxu0 %v1593
  %1854 = vmatprep.subr.mxu0 0.0
  %1855 = vmatpush1.msra.mxu0 %v1594
  %1856 = vmatprep.subr.mxu0 0.0
  %1857 = vmatpush1.msra.mxu0 %v1595
  %1858 = vmatprep.subr.mxu0 0.0
  %1859 = vmatpush1.msra.mxu0 %v1596
  %1860 = vmatprep.subr.mxu0 0.0
  %1861 = vmatpush1.msra.mxu0 %v1597
  %1862 = vmatprep.subr.mxu0 0.0
  %1863 = vmatpush1.msra.mxu0 %v1598
  %1864 = vmatprep.subr.mxu0 0.0
  %1865 = vmatpush1.msra.mxu0 %v1599
  %1866 = vmatprep.subr.mxu0 0.0
  %1867 = vmatpush1.msra.mxu0 %v1600
  %1868 = vmatprep.subr.mxu0 0.0
  %1869 = vmatpush1.msra.mxu0 %v1601
  %1870 = vmatprep.subr.mxu0 0.0
  %1871 = vmatpush1.msra.mxu0 %v1602
  %1872 = vmatprep.subr.mxu0 0.0
  %1873 = vmatpush1.msra.mxu0 %v1603
  %1874 = vmatprep.subr.mxu0 0.0
  %1875 = vmatpush1.msra.mxu0 %v1604
  %1876 = vmatprep.subr.mxu0 0.0
  %1877 = vmatpush1.msra.mxu0 %v1605
  %1878 = vmatprep.subr.mxu0 0.0
  %1879 = vmatpush1.msra.mxu0 %v1606
  %1880 = vmatprep.subr.mxu0 0.0
  %1881 = vmatpush1.msra.mxu0 %v1607
  %1882 = vmatprep.subr.mxu0 0.0
  %1883 = vmatpush1.msra.mxu0 %v1608
  %1884 = vmatprep.subr.mxu0 0.0
  %1885 = vmatpush1.msra.mxu0 %v1609
  %1886 = vmatprep.subr.mxu0 0.0
  %1887 = vmatpush1.msra.mxu0 %v1610
  %1888 = vmatprep.subr.mxu0 0.0
  %1889 = vmatpush1.msra.mxu0 %v1611
  %1890 = vmatprep.subr.mxu0 0.0
  %1891 = vmatpush1.msra.mxu0 %v1612
  %1892 = vmatprep.subr.mxu0 0.0
  %1893 = vmatpush1.msra.mxu0 %v1613
  %1894 = vmatprep.subr.mxu0 0.0
  %1895 = vmatpush1.msra.mxu0 %v1614
  %1896 = vmatprep.subr.mxu0 0.0
  %1897 = vmatpush1.msra.mxu0 %v1615
  %1898 = vmatprep.subr.mxu0 0.0
  %1899 = vmatpush1.msra.mxu0 %v1616
  %1900 = vmatprep.subr.mxu0 0.0
  %1901 = vmatpush1.msra.mxu0 %v1617
  %1902 = vmatprep.subr.mxu0 0.0
  %1903 = vmatpush1.msra.mxu0 %v1618
  %1904 = vmatprep.subr.mxu0 0.0
  %1905 = vmatpush1.msra.mxu0 %v1619
  %1906 = vmatprep.subr.mxu0 0.0
  %1907 = vmatpush1.msra.mxu0 %v1620
  %1908 = vmatprep.subr.mxu0 0.0
  %1909 = vmatpush1.msra.mxu0 %v1621
  %1910 = vmatprep.subr.mxu0 0.0
  %1911 = vmatpush1.msra.mxu0 %v1622
  %1912 = vmatprep.mubr.f32.mxu0 %v1402
  %1913 = vmatmul.mubr.f32.gmra.mrb[0].mxu0 %v1401
  %v1914 = vpop.f32.mrb[0].mxu0
  %v1915 = vadd.f32 %v1690, %v1914
  %v1916 = vpop.f32.mrb[0].mxu0
  %1917 = vmatprep.mubr.f32.mxu0 %v1406
  %1918 = vmatmul.mubr.f32.gmra.mrb[0].mxu0 %v1405
  %v1919 = vpop.f32.mrb[0].mxu0
  %v1920 = vadd.f32 %v1695, %v1919
  %v1921 = vpop.f32.mrb[0].mxu0
  %1922 = vmatprep.mubr.f32.mxu0 %v1410
  %1923 = vmatmul.mubr.f32.gmra.mrb[0].mxu0 %v1409
  %v1924 = vpop.f32.mrb[0].mxu0
  %v1925 = vadd.f32 %v1700, %v1924
  %v1926 = vpop.f32.mrb[0].mxu0
  %1927 = vmatprep.mubr.f32.mxu0 %v1414
  %1928 = vmatmul.mubr.f32.gmra.mrb[0].mxu0 %v1413
  %v1929 = vpop.f32.mrb[0].mxu0
  %v1930 = vadd.f32 %v1705, %v1929
  %v1931 = vpop.f32.mrb[0].mxu0
  %1932 = vmatprep.mubr.f32.mxu0 %v1418
  %1933 = vmatmul.mubr.f32.gmra.mrb[0].mxu0 %v1417
  %v1934 = vpop.f32.mrb[0].mxu0
  %v1935 = vadd.f32 %v1710, %v1934
  %v1936 = vpop.f32.mrb[0].mxu0
  %1937 = vmatprep.mubr.f32.mxu0 %v1422
  %1938 = vmatmul.mubr.f32.gmra.mrb[0].mxu0 %v1421
  %v1939 = vpop.f32.mrb[0].mxu0
  %v1940 = vadd.f32 %v1715, %v1939
  %v1941 = vpop.f32.mrb[0].mxu0
  %1942 = vmatprep.mubr.f32.mxu0 %v1426
  %1943 = vmatmul.mubr.f32.gmra.mrb[0].mxu0 %v1425
  %v1944 = vpop.f32.mrb[0].mxu0
  %v1945 = vadd.f32 %v1720, %v1944
  %v1946 = vpop.f32.mrb[0].mxu0
  %1947 = vmatprep.mubr.f32.mxu0 %v1430
  %1948 = vmatmul.mubr.f32.gmra.mrb[0].mxu0 %v1429
  %v1949 = vpop.f32.mrb[0].mxu0
  %v1950 = vadd.f32 %v1725, %v1949
  %v1951 = vpop.f32.mrb[0].mxu0
  %1952 = vmatprep.mubr.f32.mxu0 %v1434
  %1953 = vmatmul.mubr.f32.gmra.mrb[0].mxu0 %v1433
  %v1954 = vpop.f32.mrb[0].mxu0
  %v1955 = vadd.f32 %v1730, %v1954
  %v1956 = vpop.f32.mrb[0].mxu0
  %1957 = vmatprep.mubr.f32.mxu0 %v1438
  %1958 = vmatmul.mubr.f32.gmra.mrb[0].mxu0 %v1437
  %v1959 = vpop.f32.mrb[0].mxu0
  %v1960 = vadd.f32 %v1735, %v1959
  %v1961 = vpop.f32.mrb[0].mxu0
  %1962 = vmatprep.mubr.f32.mxu0 %v1442
  %1963 = vmatmul.mubr.f32.gmra.mrb[0].mxu0 %v1441
  %v1964 = vpop.f32.mrb[0].mxu0
  %v1965 = vadd.f32 %v1740, %v1964
  %v1966 = vpop.f32.mrb[0].mxu0
  %1967 = vmatprep.mubr.f32.mxu0 %v1446
  %1968 = vmatmul.mubr.f32.gmra.mrb[0].mxu0 %v1445
  %v1969 = vpop.f32.mrb[0].mxu0
  %v1970 = vadd.f32 %v1745, %v1969
  %v1971 = vpop.f32.mrb[0].mxu0
  %1972 = vmatprep.mubr.f32.mxu0 %v1450
  %1973 = vmatmul.mubr.f32.gmra.mrb[0].mxu0 %v1449
  %v1974 = vpop.f32.mrb[0].mxu0
  %v1975 = vadd.f32 %v1750, %v1974
  %v1976 = vpop.f32.mrb[0].mxu0
  %1977 = vmatprep.mubr.f32.mxu0 %v1454
  %1978 = vmatmul.mubr.f32.gmra.mrb[0].mxu0 %v1453
  %v1979 = vpop.f32.mrb[0].mxu0
  %v1980 = vadd.f32 %v1755, %v1979
  %v1981 = vpop.f32.mrb[0].mxu0
  %1982 = vmatprep.mubr.f32.mxu0 %v1458
  %1983 = vmatmul.mubr.f32.gmra.mrb[0].mxu0 %v1457
  %v1984 = vpop.f32.mrb[0].mxu0
  %v1985 = vadd.f32 %v1760, %v1984
  %v1986 = vpop.f32.mrb[0].mxu0
  %1987 = vmatprep.mubr.f32.mxu0 %v1462
  %1988 = vmatmul.mubr.f32.gmra.mrb[0].mxu0 %v1461
  %v1989 = vpop.f32.mrb[0].mxu0
  %v1990 = vadd.f32 %v1765, %v1989
  %v1991 = vpop.f32.mrb[0].mxu0
  %1992 = vmatprep.mubr.f32.mxu0 %v1466
  %1993 = vmatmul.mubr.f32.gmra.mrb[0].mxu0 %v1465
  %v1994 = vpop.f32.mrb[0].mxu0
  %v1995 = vadd.f32 %v1770, %v1994
  %v1996 = vpop.f32.mrb[0].mxu0
  %1997 = vmatprep.mubr.f32.mxu0 %v1470
  %1998 = vmatmul.mubr.f32.gmra.mrb[0].mxu0 %v1469
  %v1999 = vpop.f32.mrb[0].mxu0
  %v2000 = vadd.f32 %v1775, %v1999
  %v2001 = vpop.f32.mrb[0].mxu0
  %2002 = vmatprep.mubr.f32.mxu0 %v1474
  %2003 = vmatmul.mubr.f32.gmra.mrb[0].mxu0 %v1473
  %v2004 = vpop.f32.mrb[0].mxu0
  %v2005 = vadd.f32 %v1780, %v2004
  %v2006 = vpop.f32.mrb[0].mxu0
  %2007 = vmatprep.mubr.f32.mxu0 %v1478
  %2008 = vmatmul.mubr.f32.gmra.mrb[0].mxu0 %v1477
  %v2009 = vpop.f32.mrb[0].mxu0
  %v2010 = vadd.f32 %v1785, %v2009
  %v2011 = vpop.f32.mrb[0].mxu0
  %2012 = vmatprep.mubr.f32.mxu0 %v1482
  %2013 = vmatmul.mubr.f32.gmra.mrb[0].mxu0 %v1481
  %v2014 = vpop.f32.mrb[0].mxu0
  %v2015 = vadd.f32 %v1790, %v2014
  %v2016 = vpop.f32.mrb[0].mxu0
  %2017 = vmatprep.mubr.f32.mxu0 %v1486
  %2018 = vmatmul.mubr.f32.gmra.mrb[0].mxu0 %v1485
  %v2019 = vpop.f32.mrb[0].mxu0
  %v2020 = vadd.f32 %v1795, %v2019
  %v2021 = vpop.f32.mrb[0].mxu0
  %2022 = vmatprep.mubr.f32.mxu0 %v1490
  %2023 = vmatmul.mubr.f32.gmra.mrb[0].mxu0 %v1489
  %v2024 = vpop.f32.mrb[0].mxu0
  %v2025 = vadd.f32 %v1800, %v2024
  %v2026 = vpop.f32.mrb[0].mxu0
  %2027 = vmatprep.mubr.f32.mxu0 %v1494
  %2028 = vmatmul.mubr.f32.gmra.mrb[0].mxu0 %v1493
  %v2029 = vpop.f32.mrb[0].mxu0
  %v2030 = vadd.f32 %v1805, %v2029
  %v2031 = vpop.f32.mrb[0].mxu0
  %2032 = vmatprep.mubr.f32.mxu0 %v1498
  %2033 = vmatmul.mubr.f32.gmra.mrb[0].mxu0 %v1497
  %v2034 = vpop.f32.mrb[0].mxu0
  %v2035 = vadd.f32 %v1810, %v2034
  %v2036 = vpop.f32.mrb[0].mxu0
  %2037 = vmatprep.mubr.f32.mxu0 %v1502
  %2038 = vmatmul.mubr.f32.gmra.mrb[0].mxu0 %v1501
  %v2039 = vpop.f32.mrb[0].mxu0
  %v2040 = vadd.f32 %v1815, %v2039
  %v2041 = vpop.f32.mrb[0].mxu0
  %2042 = vmatprep.mubr.f32.mxu0 %v1506
  %2043 = vmatmul.mubr.f32.gmra.mrb[0].mxu0 %v1505
  %v2044 = vpop.f32.mrb[0].mxu0
  %v2045 = vadd.f32 %v1820, %v2044
  %v2046 = vpop.f32.mrb[0].mxu0
  %2047 = vmatprep.mubr.f32.mxu0 %v1510
  %2048 = vmatmul.mubr.f32.gmra.mrb[0].mxu0 %v1509
  %v2049 = vpop.f32.mrb[0].mxu0
  %v2050 = vadd.f32 %v1825, %v2049
  %v2051 = vpop.f32.mrb[0].mxu0
  %2052 = vmatprep.mubr.f32.mxu0 %v1514
  %2053 = vmatmul.mubr.f32.gmra.mrb[0].mxu0 %v1513
  %v2054 = vpop.f32.mrb[0].mxu0
  %v2055 = vadd.f32 %v1830, %v2054
  %v2056 = vpop.f32.mrb[0].mxu0
  %2057 = vmatprep.mubr.f32.mxu0 %v1518
  %2058 = vmatmul.mubr.f32.gmra.mrb[0].mxu0 %v1517
  %v2059 = vpop.f32.mrb[0].mxu0
  %v2060 = vadd.f32 %v1835, %v2059
  %v2061 = vpop.f32.mrb[0].mxu0
  %2062 = vmatprep.mubr.f32.mxu0 %v1522
  %2063 = vmatmul.mubr.f32.gmra.mrb[0].mxu0 %v1521
  %v2064 = vpop.f32.mrb[0].mxu0
  %v2065 = vadd.f32 %v1840, %v2064
  %v2066 = vpop.f32.mrb[0].mxu0
  %2067 = vmatprep.mubr.f32.mxu0 %v1526
  %2068 = vmatmul.mubr.f32.gmra.mrb[0].mxu0 %v1525
  %v2069 = vpop.f32.mrb[0].mxu0
  %v2070 = vadd.f32 %v1845, %v2069
  %v2071 = vpop.f32.mrb[0].mxu0
  %2072 = vdwg.mxu0
  %v2073 = vadd.f32 %v1527, %v1915
  %v2074 = vadd.f32 %v1528, %v1920
  %v2075 = vadd.f32 %v1529, %v1925
  %v2076 = vadd.f32 %v1530, %v1930
  %v2077 = vadd.f32 %v1531, %v1935
  %v2078 = vadd.f32 %v1532, %v1940
  %v2079 = vadd.f32 %v1533, %v1945
  %v2080 = vadd.f32 %v1534, %v1950
  %v2081 = vadd.f32 %v1535, %v1955
  %v2082 = vadd.f32 %v1536, %v1960
  %v2083 = vadd.f32 %v1537, %v1965
  %v2084 = vadd.f32 %v1538, %v1970
  %v2085 = vadd.f32 %v1539, %v1975
  %v2086 = vadd.f32 %v1540, %v1980
  %v2087 = vadd.f32 %v1541, %v1985
  %v2088 = vadd.f32 %v1542, %v1990
  %v2089 = vadd.f32 %v1543, %v1995
  %v2090 = vadd.f32 %v1544, %v2000
  %v2091 = vadd.f32 %v1545, %v2005
  %v2092 = vadd.f32 %v1546, %v2010
  %v2093 = vadd.f32 %v1547, %v2015
  %v2094 = vadd.f32 %v1548, %v2020
  %v2095 = vadd.f32 %v1549, %v2025
  %v2096 = vadd.f32 %v1550, %v2030
  %v2097 = vadd.f32 %v1551, %v2035
  %v2098 = vadd.f32 %v1552, %v2040
  %v2099 = vadd.f32 %v1553, %v2045
  %v2100 = vadd.f32 %v1554, %v2050
  %v2101 = vadd.f32 %v1555, %v2055
  %v2102 = vadd.f32 %v1556, %v2060
  %v2103 = vadd.f32 %v1557, %v2065
  %v2104 = vadd.f32 %v1558, %v2070
  %vm2105 = vcmask 130048
  %2106 = vst.msk [vmem:[#allocation3] sm:$0xff] %vm2105, %v2073
  %2107 = vst.msk [vmem:[#allocation3 + $0x8] sm:$0xff] %vm2105, %v2074
  %2108 = vst.msk [vmem:[#allocation3 + $0x10] sm:$0xff] %vm2105, %v2075
  %2109 = vst.msk [vmem:[#allocation3 + $0x18] sm:$0xff] %vm2105, %v2076
  %2110 = vst.msk [vmem:[#allocation3 + $0x20] sm:$0xff] %vm2105, %v2077
  %2111 = vst.msk [vmem:[#allocation3 + $0x28] sm:$0xff] %vm2105, %v2078
  %2112 = vst.msk [vmem:[#allocation3 + $0x30] sm:$0xff] %vm2105, %v2079
  %2113 = vst.msk [vmem:[#allocation3 + $0x38] sm:$0xff] %vm2105, %v2080
  %2114 = vst.msk [vmem:[#allocation3 + $0x40] sm:$0xff] %vm2105, %v2081
  %2115 = vst.msk [vmem:[#allocation3 + $0x48] sm:$0xff] %vm2105, %v2082
  %2116 = vst.msk [vmem:[#allocation3 + $0x50] sm:$0xff] %vm2105, %v2083
  %2117 = vst.msk [vmem:[#allocation3 + $0x58] sm:$0xff] %vm2105, %v2084
  %2118 = vst.msk [vmem:[#allocation3 + $0x60] sm:$0xff] %vm2105, %v2085
  %2119 = vst.msk [vmem:[#allocation3 + $0x68] sm:$0xff] %vm2105, %v2086
  %2120 = vst.msk [vmem:[#allocation3 + $0x70] sm:$0xff] %vm2105, %v2087
  %2121 = vst.msk [vmem:[#allocation3 + $0x78] sm:$0xff] %vm2105, %v2088
  %2122 = vst.msk [vmem:[#allocation3 + $0x80] sm:$0xff] %vm2105, %v2089
  %2123 = vst.msk [vmem:[#allocation3 + $0x88] sm:$0xff] %vm2105, %v2090
  %2124 = vst.msk [vmem:[#allocation3 + $0x90] sm:$0xff] %vm2105, %v2091
  %2125 = vst.msk [vmem:[#allocation3 + $0x98] sm:$0xff] %vm2105, %v2092
  %2126 = vst.msk [vmem:[#allocation3 + $0xa0] sm:$0xff] %vm2105, %v2093
  %2127 = vst.msk [vmem:[#allocation3 + $0xa8] sm:$0xff] %vm2105, %v2094
  %2128 = vst.msk [vmem:[#allocation3 + $0xb0] sm:$0xff] %vm2105, %v2095
  %2129 = vst.msk [vmem:[#allocation3 + $0xb8] sm:$0xff] %vm2105, %v2096
  %2130 = vst.msk [vmem:[#allocation3 + $0xc0] sm:$0xff] %vm2105, %v2097
  %2131 = vst.msk [vmem:[#allocation3 + $0xc8] sm:$0xff] %vm2105, %v2098
  %2132 = vst.msk [vmem:[#allocation3 + $0xd0] sm:$0xff] %vm2105, %v2099
  %2133 = vst.msk [vmem:[#allocation3 + $0xd8] sm:$0xff] %vm2105, %v2100
  %2134 = vst.msk [vmem:[#allocation3 + $0xe0] sm:$0xff] %vm2105, %v2101
  %2135 = vst.msk [vmem:[#allocation3 + $0xe8] sm:$0xff] %vm2105, %v2102
  %2136 = vst.msk [vmem:[#allocation3 + $0xf0] sm:$0xff] %vm2105, %v2103
  %2137 = vst.msk [vmem:[#allocation3 + $0xf8] sm:$0xff] %vm2105, %v2104
  // Predicated region
  $region34: #{mlp_forward.1} parent=0 // pred_check
    %p2138 = pneg %p26
  $region35: #{mlp_forward.1} parent=0 // pred_check_branch
    %2140 = sbr.rel (%p2138) target = $region37
  $region36: #{mlp_forward.1} parent=0 // pred_region
    %v2141 = vld [vmem:[#allocation3] sm:$0xff]
    %v2142 = vld [vmem:[#allocation3 + $0x8] sm:$0xff]
    %v2143 = vld [vmem:[#allocation3 + $0x10] sm:$0xff]
    %v2144 = vld [vmem:[#allocation3 + $0x18] sm:$0xff]
    %v2145 = vld [vmem:[#allocation3 + $0x20] sm:$0xff]
    %v2146 = vld [vmem:[#allocation3 + $0x28] sm:$0xff]
    %v2147 = vld [vmem:[#allocation3 + $0x30] sm:$0xff]
    %v2148 = vld [vmem:[#allocation3 + $0x38] sm:$0xff]
    %v2149 = vld [vmem:[#allocation3 + $0x40] sm:$0xff]
    %v2150 = vld [vmem:[#allocation3 + $0x48] sm:$0xff]
    %v2151 = vld [vmem:[#allocation3 + $0x50] sm:$0xff]
    %v2152 = vld [vmem:[#allocation3 + $0x58] sm:$0xff]
    %v2153 = vld [vmem:[#allocation3 + $0x60] sm:$0xff]
    %v2154 = vld [vmem:[#allocation3 + $0x68] sm:$0xff]
    %v2155 = vld [vmem:[#allocation3 + $0x70] sm:$0xff]
    %v2156 = vld [vmem:[#allocation3 + $0x78] sm:$0xff]
    %v2157 = vld [vmem:[#allocation3 + $0x80] sm:$0xff]
    %v2158 = vld [vmem:[#allocation3 + $0x88] sm:$0xff]
    %v2159 = vld [vmem:[#allocation3 + $0x90] sm:$0xff]
    %v2160 = vld [vmem:[#allocation3 + $0x98] sm:$0xff]
    %v2161 = vld [vmem:[#allocation3 + $0xa0] sm:$0xff]
    %v2162 = vld [vmem:[#allocation3 + $0xa8] sm:$0xff]
    %v2163 = vld [vmem:[#allocation3 + $0xb0] sm:$0xff]
    %v2164 = vld [vmem:[#allocation3 + $0xb8] sm:$0xff]
    %v2165 = vld [vmem:[#allocation3 + $0xc0] sm:$0xff]
    %v2166 = vld [vmem:[#allocation3 + $0xc8] sm:$0xff]
    %v2167 = vld [vmem:[#allocation3 + $0xd0] sm:$0xff]
    %v2168 = vld [vmem:[#allocation3 + $0xd8] sm:$0xff]
    %v2169 = vld [vmem:[#allocation3 + $0xe0] sm:$0xff]
    %v2170 = vld [vmem:[#allocation3 + $0xe8] sm:$0xff]
    %v2171 = vld [vmem:[#allocation3 + $0xf0] sm:$0xff]
    %v2172 = vld [vmem:[#allocation3 + $0xf8] sm:$0xff]
    %v2173 = vld [vmem:[%s6] sm:$0x1]
    %v2175 = vlaneseq
    %v2176 = vshrl.u32 %v2175, 7
    %v2177 = vsub.s32 0, %v2176
    %v2178 = vrot.slane %v2173, %v2177
    %v2180 = vadd.f32 %v2141, %v2178
    %v2181 = vadd.f32 %v2142, %v2178
    %v2182 = vadd.f32 %v2143, %v2178
    %v2183 = vadd.f32 %v2144, %v2178
    %v2184 = vadd.f32 %v2145, %v2178
    %v2185 = vadd.f32 %v2146, %v2178
    %v2186 = vadd.f32 %v2147, %v2178
    %v2187 = vadd.f32 %v2148, %v2178
    %v2188 = vadd.f32 %v2149, %v2178
    %v2189 = vadd.f32 %v2150, %v2178
    %v2190 = vadd.f32 %v2151, %v2178
    %v2191 = vadd.f32 %v2152, %v2178
    %v2192 = vadd.f32 %v2153, %v2178
    %v2193 = vadd.f32 %v2154, %v2178
    %v2194 = vadd.f32 %v2155, %v2178
    %v2195 = vadd.f32 %v2156, %v2178
    %v2196 = vadd.f32 %v2157, %v2178
    %v2197 = vadd.f32 %v2158, %v2178
    %v2198 = vadd.f32 %v2159, %v2178
    %v2199 = vadd.f32 %v2160, %v2178
    %v2200 = vadd.f32 %v2161, %v2178
    %v2201 = vadd.f32 %v2162, %v2178
    %v2202 = vadd.f32 %v2163, %v2178
    %v2203 = vadd.f32 %v2164, %v2178
    %v2204 = vadd.f32 %v2165, %v2178
    %v2205 = vadd.f32 %v2166, %v2178
    %v2206 = vadd.f32 %v2167, %v2178
    %v2207 = vadd.f32 %v2168, %v2178
    %v2208 = vadd.f32 %v2169, %v2178
    %v2209 = vadd.f32 %v2170, %v2178
    %v2210 = vadd.f32 %v2171, %v2178
    %v2211 = vadd.f32 %v2172, %v2178
    %2212 = vst.msk [vmem:[%s7] sm:$0xff] %vm2105, %v2180
    %2213 = vst.msk [vmem:[%s7 + $0x8] sm:$0xff] %vm2105, %v2181
    %2214 = vst.msk [vmem:[%s7 + $0x10] sm:$0xff] %vm2105, %v2182
    %2215 = vst.msk [vmem:[%s7 + $0x18] sm:$0xff] %vm2105, %v2183
    %2216 = vst.msk [vmem:[%s7 + $0x20] sm:$0xff] %vm2105, %v2184
    %2217 = vst.msk [vmem:[%s7 + $0x28] sm:$0xff] %vm2105, %v2185
    %2218 = vst.msk [vmem:[%s7 + $0x30] sm:$0xff] %vm2105, %v2186
    %2219 = vst.msk [vmem:[%s7 + $0x38] sm:$0xff] %vm2105, %v2187
    %2220 = vst.msk [vmem:[%s7 + $0x40] sm:$0xff] %vm2105, %v2188
    %2221 = vst.msk [vmem:[%s7 + $0x48] sm:$0xff] %vm2105, %v2189
    %2222 = vst.msk [vmem:[%s7 + $0x50] sm:$0xff] %vm2105, %v2190
    %2223 = vst.msk [vmem:[%s7 + $0x58] sm:$0xff] %vm2105, %v2191
    %2224 = vst.msk [vmem:[%s7 + $0x60] sm:$0xff] %vm2105, %v2192
    %2225 = vst.msk [vmem:[%s7 + $0x68] sm:$0xff] %vm2105, %v2193
    %2226 = vst.msk [vmem:[%s7 + $0x70] sm:$0xff] %vm2105, %v2194
    %2227 = vst.msk [vmem:[%s7 + $0x78] sm:$0xff] %vm2105, %v2195
    %2228 = vst.msk [vmem:[%s7 + $0x80] sm:$0xff] %vm2105, %v2196
    %2229 = vst.msk [vmem:[%s7 + $0x88] sm:$0xff] %vm2105, %v2197
    %2230 = vst.msk [vmem:[%s7 + $0x90] sm:$0xff] %vm2105, %v2198
    %2231 = vst.msk [vmem:[%s7 + $0x98] sm:$0xff] %vm2105, %v2199
    %2232 = vst.msk [vmem:[%s7 + $0xa0] sm:$0xff] %vm2105, %v2200
    %2233 = vst.msk [vmem:[%s7 + $0xa8] sm:$0xff] %vm2105, %v2201
    %2234 = vst.msk [vmem:[%s7 + $0xb0] sm:$0xff] %vm2105, %v2202
    %2235 = vst.msk [vmem:[%s7 + $0xb8] sm:$0xff] %vm2105, %v2203
    %2236 = vst.msk [vmem:[%s7 + $0xc0] sm:$0xff] %vm2105, %v2204
    %2237 = vst.msk [vmem:[%s7 + $0xc8] sm:$0xff] %vm2105, %v2205
    %2238 = vst.msk [vmem:[%s7 + $0xd0] sm:$0xff] %vm2105, %v2206
    %2239 = vst.msk [vmem:[%s7 + $0xd8] sm:$0xff] %vm2105, %v2207
    %2240 = vst.msk [vmem:[%s7 + $0xe0] sm:$0xff] %vm2105, %v2208
    %2241 = vst.msk [vmem:[%s7 + $0xe8] sm:$0xff] %vm2105, %v2209
    %2242 = vst.msk [vmem:[%s7 + $0xf0] sm:$0xff] %vm2105, %v2210
    %2243 = vst.msk [vmem:[%s7 + $0xf8] sm:$0xff] %vm2105, %v2211
  $region37: #{mlp_forward.1} parent=0 // pred_fallthru
    _
  // Predicated region
  $region38: #{mlp_forward.1} parent=0 // pred_check
    _
  $region39: #{mlp_forward.1} parent=0 // pred_check_branch
    %2245 = sbr.rel (0) target = $region41
  $region40: #{mlp_forward.1} parent=0 // pred_region
    _
  $region41: #{mlp_forward.1} parent=0 // pred_fallthru
    _
  // Predicated region
  $region42: #{mlp_forward.1} parent=0 // pred_check
    _
  $region43: #{mlp_forward.1} parent=0 // pred_check_branch
    %2247 = sbr.rel (0) target = $region45
  $region44: #{mlp_forward.1} parent=0 // pred_region
    _
  $region45: #{mlp_forward.1} parent=0 // pred_fallthru
    _

</llo_original>
